<compile_context>
chip_gen: v6e
topology: v6e:2x2x1
jax: 0.10.0
libtpu: 0.0.40
codegen_flags: <defaults>
</compile_context>

<pallas_src>
import math
from functools import partial

import numpy as np
import jax
import jax.numpy as jnp
from jax.experimental import pallas as pl
from jax.experimental.pallas import tpu as pltpu


def _round_up(v, m):
    return ((v + m - 1) // m) * m


def _invariant_spec(block_shape, index_map):
    """BlockSpec for a grid-invariant operand: request a single VMEM buffer."""
    try:
        return pl.BlockSpec(block_shape, index_map, pipeline_mode=pl.Buffered(1))
    except TypeError:  # pipeline_mode kwarg unavailable -> default buffering
        return pl.BlockSpec(block_shape, index_map)


# -----------------------------------------------------------------------------
# FFT period selection (glue).
# TODO(synk): torch.fft.rfft + topk drive data-dependent *shapes* (length // period),
# so -- like the original's .detach().cpu().numpy() -- the period indices are resolved
# host-side once per call; everything downstream is jitted with static periods.
# -----------------------------------------------------------------------------
def fft_for_period(x, k=2):
    xf = jnp.fft.rfft(x, axis=1)
    amp = jnp.abs(xf)
    frequency_list = amp.mean(axis=0).mean(axis=-1)
    frequency_list = frequency_list.at[0].set(0.0)
    _, top_idx = jax.lax.top_k(frequency_list, k)
    top_list = np.asarray(top_idx)                      # host sync (mirrors .cpu().numpy())
    top_list = np.maximum(top_list, 1)                  # guard: never divide by frequency 0
    period = x.shape[1] // top_list                     # numpy ints
    period_weight = amp.mean(axis=-1)[:, top_idx]       # (B, k)
    return period, period_weight


# -----------------------------------------------------------------------------
# Pallas kernel 1: fused conv(KxK,'same') -> GELU(exact) -> conv(KxK,'same'),
# one batch element per grid step, each conv = ONE im2col MXU matmul.
#
# x_ref[0] is the batch element's zero-padded NCHW image flattened over (Hp, Wp) onto
# the lane axis (bf16), with a 2*S zero halo on each side (S = P*Wp + P = max
# |flattened tap offset|).  Tap (dy, dx) of either conv is then a *static lane slice*,
# so the im2col patch matrices are sublane concats of bf16 slices -- no scratch, no
# rolls.  conv1 is evaluated on an extended (halo) range of centers; a precomputed
# validity mask zeroes padding/halo centers, and conv2 reads those zeros as its 'same'
# padding.  Spatial extents Qp_pad / Qe_pad are multiples of 128 (lane-dense MXU columns
# and unmasked output stores).
# -----------------------------------------------------------------------------
def make_conv_kernel(K, P, Wp, S, Qp_pad, Qe_pad):
    inv_sqrt2 = 1.0 / math.sqrt(2.0)
    offs = [(dy - P) * Wp + (dx - P) for dy in range(K) for dx in range(K)]

    def kernel(x_ref, m_ref, w1_ref, b1_ref, w2_ref, b2_ref, o_ref):
        x = x_ref[0]                                    # (Cin, Qe_pad + 2S)  bf16
        m = m_ref[...]                                  # (1, Qe_pad)         f32 validity mask

        # ---- conv1: d_model -> d_ff, single matmul (contraction = K*K*Cin) ----
        # Patch rows ordered (dy, dx, cin) to match the flattened weight matrix; the
        # source is already bf16, so the 25x-amplified patch never exists in f32.
        p1 = jnp.concatenate([x[:, S + s: S + s + Qe_pad] for s in offs], axis=0)
        acc1 = jnp.dot(w1_ref[...], p1, preferred_element_type=jnp.float32)   # (Cmid, Qe_pad)
        acc1 = acc1 + b1_ref[...]

        # exact GELU (matches torch.nn.GELU default), f32 on the VPU/EUP.
        # TODO(synk): on v6e/v7x, if bundle dumps show VALU binding, switch to bf16 /
        # tanh-approx GELU (EUP slot); kept exact-f32 here for parity with torch.
        g = 0.5 * acc1 * (1.0 + jax.lax.erf(acc1 * inv_sqrt2))
        # Zero the spatial-padding / halo / lane-padding centers: these zeros ARE conv2's
        # 'same' padding.  Cast to bf16 immediately so the conv2 patch build is bf16.
        h = (g * m).astype(jnp.bfloat16)                                      # (Cmid, Qe_pad)

        # ---- conv2: d_ff -> d_model, single matmul (contraction = K*K*Cmid) ----
        p2 = jnp.concatenate([h[:, S + s: S + s + Qp_pad] for s in offs], axis=0)
        acc2 = jnp.dot(w2_ref[...], p2, preferred_element_type=jnp.float32)   # (Cout, Qp_pad)
        o_ref[0] = acc2 + b2_ref[...]

    return kernel


def _vmem_limit_bytes(*, Cin, Cmid, Cout, KK, Lx, Qe_pad, Qp_pad):
    bf2, f4 = 2, 4
    est = (2 * Cin * Lx * bf2                 # x_ext (double-buffered)
           + Qe_pad * f4                      # mask (single-buffered)
           + Cmid * KK * Cin * bf2 + Cmid * f4  # w1, b1 (single-buffered)
           + Cout * KK * Cmid * bf2 + Cout * f4  # w2, b2 (single-buffered)
           + 2 * Cout * Qp_pad * f4           # output (double-buffered)
           + KK * Cin * Qe_pad * bf2          # p1 patch matrix
           + 2 * Cmid * Qe_pad * f4           # acc1 + GELU temps
           + Cmid * Qe_pad * bf2              # h (bf16)
           + KK * Cmid * Qp_pad * bf2         # p2 patch matrix
           + Cout * Qp_pad * f4)              # acc2
    return int(min(max(4 * est, 16 * 1024 * 1024), 64 * 1024 * 1024))


def conv_pipeline(x_ext, mask_e, w1mat, b1, w2mat, b2, *,
                  K, P, Wp, S, Qp_pad, Qe_pad):
    """x_ext: (B, Cin, Qe_pad + 2S) bf16; returns (B, Cout, Qp_pad) f32
    (junk at padding / lane-padding centers; wrapper crops)."""
    B, Cin, Lx = x_ext.shape
    Cmid = w1mat.shape[0]
    Cout = w2mat.shape[0]
    KK = K * K
    kernel = make_conv_kernel(K, P, Wp, S, Qp_pad, Qe_pad)
    vmem_limit = _vmem_limit_bytes(Cin=Cin, Cmid=Cmid, Cout=Cout, KK=KK,
                                   Lx=Lx, Qe_pad=Qe_pad, Qp_pad=Qp_pad)
    return pl.pallas_call(
        kernel,
        out_shape=jax.ShapeDtypeStruct((B, Cout, Qp_pad), jnp.float32),
        grid=(B,),
        in_specs=[
            pl.BlockSpec((1, Cin, Lx), lambda b: (b, 0, 0)),
            _invariant_spec((1, Qe_pad), lambda b: (0, 0)),
            _invariant_spec((Cmid, w1mat.shape[1]), lambda b: (0, 0)),
            _invariant_spec((Cmid, 1), lambda b: (0, 0)),
            _invariant_spec((Cout, w2mat.shape[1]), lambda b: (0, 0)),
            _invariant_spec((Cout, 1), lambda b: (0, 0)),
        ],
        out_specs=pl.BlockSpec((1, Cout, Qp_pad), lambda b: (b, 0, 0)),
        # grid=(B,) 'parallel' so v7x's two TensorCores both get work (B >= 2 here).
        compiler_params=pltpu.CompilerParams(
            dimension_semantics=("parallel",),
            vmem_limit_bytes=vmem_limit),
    )(x_ext, mask_e, w1mat, b1, w2mat, b2)


# -----------------------------------------------------------------------------
# Pallas kernel 2: weighted sum of the k period reconstructions + residual add.
# Softmax is done in the wrapper.  Blocks are (Bblk, T*N) lane-dense slabs with
# Bblk = min(B, 8) rows per grid step (full sublane utilization); the k normalized
# weights are a (Bblk, k) VMEM block, broadcast along lanes.
# -----------------------------------------------------------------------------
def make_combine_kernel(k):
    def kernel(w_ref, x_ref, *rest):
        r_refs, o_ref = rest[:k], rest[k]
        w = w_ref[...]                                  # (Bblk, k) f32
        acc = x_ref[...]                                # residual (Bblk, T*N) f32
        for i in range(k):
            acc = acc + r_refs[i][...] * w[:, i:i + 1]  # column broadcast along lanes
        o_ref[...] = acc

    return kernel


def combine(period_weight_softmax, x_flat, res_flat):
    B, TN = x_flat.shape
    k = len(res_flat)
    bblk = min(B, 8)
    grid = (pl.cdiv(B, bblk),)
    in_specs = [pl.BlockSpec((bblk, k), lambda b: (b, 0))]
    in_specs += [pl.BlockSpec((bblk, TN), lambda b: (b, 0)) for _ in range(k + 1)]
    return pl.pallas_call(
        make_combine_kernel(k),
        out_shape=jax.ShapeDtypeStruct((B, TN), jnp.float32),
        grid=grid,
        in_specs=in_specs,
        out_specs=pl.BlockSpec((bblk, TN), lambda b: (b, 0)),
        compiler_params=pltpu.CompilerParams(dimension_semantics=("parallel",)),
    )(period_weight_softmax, x_flat, *res_flat)


# -----------------------------------------------------------------------------
# Parameters: two Inception_Block_V1 blocks folded (by linearity) into single
# effective KxK convs, then flattened to (Cout, K*K*Cin) bf16 matmul weights.
# -----------------------------------------------------------------------------
def init_params(key, d_model, d_ff, num_kernels):
    K = 2 * (num_kernels - 1) + 1

    def init_block(key, cin, cout):
        w_eff = jnp.zeros((K, K, cin, cout), jnp.float32)           # HWIO
        for i in range(num_kernels):
            ksz = 2 * i + 1
            key, sub = jax.random.split(key)
            fan_in = cin * ksz * ksz
            w = jax.random.normal(sub, (cout, cin, ksz, ksz), jnp.float32) \
                * math.sqrt(2.0 / fan_in)                           # kaiming-normal-like
            off = (K - ksz) // 2
            w_hwio = jnp.transpose(w, (2, 3, 1, 0))                 # OIHW -> HWIO
            w_eff = w_eff.at[off:off + ksz, off:off + ksz, :, :].add(w_hwio)
        w_eff = w_eff / num_kernels
        # (K, K, cin, cout) -> (cout, K*K*cin), row-major over (dy, dx, cin)
        wmat = jnp.transpose(w_eff, (3, 0, 1, 2)).reshape(cout, K * K * cin)
        wmat = wmat.astype(jnp.bfloat16)
        bias = jnp.zeros((cout, 1), jnp.float32)                    # Inception biases init 0
        return wmat, bias, key

    w1, b1, key = init_block(key, d_model, d_ff)
    w2, b2, key = init_block(key, d_ff, d_model)
    return (w1, b1, w2, b2)


# -----------------------------------------------------------------------------
# TimesBlock forward
# -----------------------------------------------------------------------------
def _build_period_inputs(x, period, total, P):
    """Static layout plumbing for one period: pad time, NCHW-flatten, halo + lane-pad, mask."""
    B, T, N = x.shape
    if total % period != 0:
        length = (total // period + 1) * period
        pad = jnp.zeros((B, length - total, N), x.dtype)
        out = jnp.concatenate([x, pad], axis=1)
    else:
        length = total
        out = x
    H, W = length // period, period
    Hp, Wp = H + 2 * P, W + 2 * P
    S = P * Wp + P                                 # max |flattened tap offset|
    Qp = Hp * Wp
    Qp_pad = _round_up(Qp, 128)                    # lane-dense conv2 output columns
    Qe_pad = _round_up(Qp_pad + 2 * S, 128)        # lane-dense extended conv1 centers
    Lx = Qe_pad + 2 * S
    # (B, length, N) -> NCHW (B, N, H, W) -> zero 'same' padding -> flatten -> halo + pad
    x4 = jnp.transpose(out.reshape(B, H, W, N), (0, 3, 1, 2))
    x4 = jnp.pad(x4, ((0, 0), (0, 0), (P, P), (P, P)))
    flat = x4.reshape(B, N, Qp)
    x_ext = jnp.pad(flat, ((0, 0), (0, 0), (2 * S, Lx - Qp - 2 * S)))
    x_ext = x_ext.astype(jnp.bfloat16)             # bf16 BEFORE the im2col build
    # Validity mask over the Qe_pad extended conv1 centers (pure numpy -> constant).
    pos = np.arange(Qe_pad) - S                    # flattened padded-image position
    ip, jp = pos // Wp, pos % Wp
    valid = (pos >= 0) & (pos < Qp) & (ip >= P) & (ip < P + H) & (jp >= P) & (jp < P + W)
    mask_e = jnp.asarray(valid, dtype=jnp.float32).reshape(1, Qe_pad)
    dims = dict(length=length, H=H, W=W, Hp=Hp, Wp=Wp, S=S,
                Qp=Qp, Qp_pad=Qp_pad, Qe_pad=Qe_pad, Lx=Lx)
    return x_ext, mask_e, dims


@partial(jax.jit, static_argnames=("periods", "total", "num_kernels"))
def _times_block_body(x, period_weight, params, periods, total, num_kernels):
    B, T, N = x.shape
    K = 2 * (num_kernels - 1) + 1
    P = (K - 1) // 2
    w1mat, b1, w2mat, b2 = params

    res_flat = []
    for period in periods:
        x_ext, mask_e, d = _build_period_inputs(x, period, total, P)
        conv = conv_pipeline(x_ext, mask_e, w1mat, b1, w2mat, b2,
                             K=K, P=P, Wp=d["Wp"], S=d["S"],
                             Qp_pad=d["Qp_pad"], Qe_pad=d["Qe_pad"])
        # crop the 'same'-padding halo / lane padding and return to a (B, length*N) slab.
        # TODO(synk): wrapper-side crop+transpose is an extra HBM pass per period (matters
        # most on v5e); could be folded into the combine kernel via per-row index_maps.
        c = conv[:, :, :d["Qp"]].reshape(B, N, d["Hp"], d["Wp"])
        c = c[:, :, P:P + d["H"], P:P + d["W"]]
        c = jnp.transpose(c, (0, 2, 3, 1)).reshape(B, d["length"] * N)
        res_flat.append(c[:, :total * N])

    # softmax over the k periods in the wrapper (combine kernel stays a pure weighted add)
    pw = jax.nn.softmax(period_weight, axis=1)                       # (B, k)
    out_flat = combine(pw, x.reshape(B, T * N), res_flat)            # Pallas kernel
    return out_flat.reshape(B, T, N)


def times_block_forward(x, params, seq_len, pred_len, top_k, num_kernels):
    total = seq_len + pred_len
    period_list, period_weight = fft_for_period(x, top_k)
    periods = tuple(int(p) for p in period_list)
    return _times_block_body(x, period_weight, params,
                             periods=periods, total=total, num_kernels=num_kernels)


# -----------------------------------------------------------------------------
# Pure-JAX f32 reference (mirrors the torch module) for tolerance checking.
# -----------------------------------------------------------------------------
def times_block_reference(x, params, periods, period_weight, total, num_kernels):
    B, T, N = x.shape
    K = 2 * (num_kernels - 1) + 1
    w1mat, b1, w2mat, b2 = params
    Cmid = w1mat.shape[0]
    w1 = jnp.transpose(w1mat.astype(jnp.float32).reshape(Cmid, K, K, N), (1, 2, 3, 0))
    w2 = jnp.transpose(w2mat.astype(jnp.float32).reshape(N, K, K, Cmid), (1, 2, 3, 0))
    dn = ("NCHW", "HWIO", "NCHW")
    res = []
    for period in periods:
        if total % period != 0:
            length = (total // period + 1) * period
            out = jnp.concatenate(
                [x, jnp.zeros((B, length - total, N), x.dtype)], axis=1)
        else:
            length = total
            out = x
        img = jnp.transpose(out.reshape(B, length // period, period, N), (0, 3, 1, 2))
        h = jax.lax.conv_general_dilated(img, w1, (1, 1), "SAME", dimension_numbers=dn)
        h = h + b1.reshape(1, Cmid, 1, 1)
        h = jax.nn.gelu(h, approximate=False)
        o = jax.lax.conv_general_dilated(h, w2, (1, 1), "SAME", dimension_numbers=dn)
        o = o + b2.reshape(1, N, 1, 1)
        o = jnp.transpose(o, (0, 2, 3, 1)).reshape(B, length, N)[:, :total]
        res.append(o)
    res = jnp.stack(res, axis=-1)                                    # (B, T, N, k)
    pw = jax.nn.softmax(period_weight, axis=1)                       # (B, k)
    return jnp.sum(res * pw[:, None, None, :], axis=-1) + x


if __name__ == "__main__":
    # configs: seq_len=16, pred_len=0, top_k=2, d_model=8, d_ff=16, num_kernels=3
    B, T, N = 2, 16, 8
    d_ff = 16
    num_kernels = 3
    top_k = 2

    key = jax.random.PRNGKey(0)
    kx, kp = jax.random.split(key)
    x = jax.random.normal(kx, (B, T, N), jnp.float32)
    params = init_params(kp, N, d_ff, num_kernels)

    y = times_block_forward(x, params, seq_len=T, pred_len=0,
                            top_k=top_k, num_kernels=num_kernels)
    y = jax.block_until_ready(y)
    assert y.shape == (B, T, N)
    assert bool(jnp.all(jnp.isfinite(y)))

    # Tolerance check against the f32 pure-JAX reference (kernel uses bf16 activations,
    # identical bf16-quantized weights -> loose absolute tolerance).
    period_list, period_weight = fft_for_period(x, top_k)
    periods = tuple(int(p) for p in period_list)
    y_ref = times_block_reference(x, params, periods, period_weight,
                                  total=T, num_kernels=num_kernels)
    err = float(jnp.max(jnp.abs(y - y_ref)))
    assert err < 1e-1, f"max abs error vs f32 reference: {err}"

    print("KERNEL_OK")
</pallas_src>

<mosaic_0001>
module attributes {stable_mosaic.version = 11 : i64} {
  func.func @kernel(%arg0: i32, %arg1: memref<1x8x308xbf16, #tpu.memory_space<vmem>>, %arg2: memref<1x256xf32, #tpu.memory_space<vmem>>, %arg3: memref<16x200xbf16, #tpu.memory_space<vmem>>, %arg4: memref<16x1xf32, #tpu.memory_space<vmem>>, %arg5: memref<8x400xbf16, #tpu.memory_space<vmem>>, %arg6: memref<8x1xf32, #tpu.memory_space<vmem>>, %arg7: memref<1x8x128xf32, #tpu.memory_space<vmem>>) attributes {dimension_semantics = [#tpu.dimension_semantics<parallel>], iteration_bounds = array<i64: 2>, scalar_prefetch = 0 : i64, scratch_operands = 0 : i64, tpu.core_type = #tpu.core_type<tc>, window_params = [{transform_indices = @transform_0, window_bounds = array<i64: 1, 8, 308>}, {pipeline_mode = #tpu.pipeline_mode<synchronous>, transform_indices = @transform_1, window_bounds = array<i64: 1, 256>}, {pipeline_mode = #tpu.pipeline_mode<synchronous>, transform_indices = @transform_2, window_bounds = array<i64: 16, 200>}, {pipeline_mode = #tpu.pipeline_mode<synchronous>, transform_indices = @transform_3, window_bounds = array<i64: 16, 1>}, {pipeline_mode = #tpu.pipeline_mode<synchronous>, transform_indices = @transform_4, window_bounds = array<i64: 8, 400>}, {pipeline_mode = #tpu.pipeline_mode<synchronous>, transform_indices = @transform_5, window_bounds = array<i64: 8, 1>}, {transform_indices = @transform_6, window_bounds = array<i64: 1, 8, 128>}]} {
    %c0 = arith.constant 0 : index
    %c0_0 = arith.constant 0 : index
    %c0_1 = arith.constant 0 : index
    %0 = vector.load %arg1[%c0, %c0_0, %c0_1] : memref<1x8x308xbf16, #tpu.memory_space<vmem>>, vector<1x8x308xbf16>
    %1 = vector.shape_cast %0 : vector<1x8x308xbf16> to vector<8x308xbf16>
    %c0_2 = arith.constant 0 : index
    %c0_3 = arith.constant 0 : index
    %2 = vector.load %arg2[%c0_2, %c0_3] : memref<1x256xf32, #tpu.memory_space<vmem>>, vector<1x256xf32>
    %3 = vector.extract_strided_slice %1 {offsets = [0, 0], sizes = [8, 256], strides = [1, 1]} : vector<8x308xbf16> to vector<8x256xbf16>
    %4 = vector.extract_strided_slice %1 {offsets = [0, 1], sizes = [8, 256], strides = [1, 1]} : vector<8x308xbf16> to vector<8x256xbf16>
    %5 = vector.extract_strided_slice %1 {offsets = [0, 2], sizes = [8, 256], strides = [1, 1]} : vector<8x308xbf16> to vector<8x256xbf16>
    %6 = vector.extract_strided_slice %1 {offsets = [0, 3], sizes = [8, 256], strides = [1, 1]} : vector<8x308xbf16> to vector<8x256xbf16>
    %7 = vector.extract_strided_slice %1 {offsets = [0, 4], sizes = [8, 256], strides = [1, 1]} : vector<8x308xbf16> to vector<8x256xbf16>
    %8 = vector.extract_strided_slice %1 {offsets = [0, 12], sizes = [8, 256], strides = [1, 1]} : vector<8x308xbf16> to vector<8x256xbf16>
    %9 = vector.extract_strided_slice %1 {offsets = [0, 13], sizes = [8, 256], strides = [1, 1]} : vector<8x308xbf16> to vector<8x256xbf16>
    %10 = vector.extract_strided_slice %1 {offsets = [0, 14], sizes = [8, 256], strides = [1, 1]} : vector<8x308xbf16> to vector<8x256xbf16>
    %11 = vector.extract_strided_slice %1 {offsets = [0, 15], sizes = [8, 256], strides = [1, 1]} : vector<8x308xbf16> to vector<8x256xbf16>
    %12 = vector.extract_strided_slice %1 {offsets = [0, 16], sizes = [8, 256], strides = [1, 1]} : vector<8x308xbf16> to vector<8x256xbf16>
    %13 = vector.extract_strided_slice %1 {offsets = [0, 24], sizes = [8, 256], strides = [1, 1]} : vector<8x308xbf16> to vector<8x256xbf16>
    %14 = vector.extract_strided_slice %1 {offsets = [0, 25], sizes = [8, 256], strides = [1, 1]} : vector<8x308xbf16> to vector<8x256xbf16>
    %15 = vector.extract_strided_slice %1 {offsets = [0, 26], sizes = [8, 256], strides = [1, 1]} : vector<8x308xbf16> to vector<8x256xbf16>
    %16 = vector.extract_strided_slice %1 {offsets = [0, 27], sizes = [8, 256], strides = [1, 1]} : vector<8x308xbf16> to vector<8x256xbf16>
    %17 = vector.extract_strided_slice %1 {offsets = [0, 28], sizes = [8, 256], strides = [1, 1]} : vector<8x308xbf16> to vector<8x256xbf16>
    %18 = vector.extract_strided_slice %1 {offsets = [0, 36], sizes = [8, 256], strides = [1, 1]} : vector<8x308xbf16> to vector<8x256xbf16>
    %19 = vector.extract_strided_slice %1 {offsets = [0, 37], sizes = [8, 256], strides = [1, 1]} : vector<8x308xbf16> to vector<8x256xbf16>
    %20 = vector.extract_strided_slice %1 {offsets = [0, 38], sizes = [8, 256], strides = [1, 1]} : vector<8x308xbf16> to vector<8x256xbf16>
    %21 = vector.extract_strided_slice %1 {offsets = [0, 39], sizes = [8, 256], strides = [1, 1]} : vector<8x308xbf16> to vector<8x256xbf16>
    %22 = vector.extract_strided_slice %1 {offsets = [0, 40], sizes = [8, 256], strides = [1, 1]} : vector<8x308xbf16> to vector<8x256xbf16>
    %23 = vector.extract_strided_slice %1 {offsets = [0, 48], sizes = [8, 256], strides = [1, 1]} : vector<8x308xbf16> to vector<8x256xbf16>
    %24 = vector.extract_strided_slice %1 {offsets = [0, 49], sizes = [8, 256], strides = [1, 1]} : vector<8x308xbf16> to vector<8x256xbf16>
    %25 = vector.extract_strided_slice %1 {offsets = [0, 50], sizes = [8, 256], strides = [1, 1]} : vector<8x308xbf16> to vector<8x256xbf16>
    %26 = vector.extract_strided_slice %1 {offsets = [0, 51], sizes = [8, 256], strides = [1, 1]} : vector<8x308xbf16> to vector<8x256xbf16>
    %27 = vector.extract_strided_slice %1 {offsets = [0, 52], sizes = [8, 256], strides = [1, 1]} : vector<8x308xbf16> to vector<8x256xbf16>
    %28 = tpu.concatenate %3, %4, %5, %6, %7, %8, %9, %10, %11, %12, %13, %14, %15, %16, %17, %18 in 0 : vector<8x256xbf16>, vector<8x256xbf16>, vector<8x256xbf16>, vector<8x256xbf16>, vector<8x256xbf16>, vector<8x256xbf16>, vector<8x256xbf16>, vector<8x256xbf16>, vector<8x256xbf16>, vector<8x256xbf16>, vector<8x256xbf16>, vector<8x256xbf16>, vector<8x256xbf16>, vector<8x256xbf16>, vector<8x256xbf16>, vector<8x256xbf16> -> vector<128x256xbf16>
    %29 = tpu.concatenate %19, %20, %21, %22, %23, %24, %25, %26, %27 in 0 : vector<8x256xbf16>, vector<8x256xbf16>, vector<8x256xbf16>, vector<8x256xbf16>, vector<8x256xbf16>, vector<8x256xbf16>, vector<8x256xbf16>, vector<8x256xbf16>, vector<8x256xbf16> -> vector<72x256xbf16>
    %30 = tpu.concatenate %28, %29 in 0 : vector<128x256xbf16>, vector<72x256xbf16> -> vector<200x256xbf16>
    %c0_4 = arith.constant 0 : index
    %c0_5 = arith.constant 0 : index
    %31 = vector.load %arg3[%c0_4, %c0_5] : memref<16x200xbf16, #tpu.memory_space<vmem>>, vector<16x200xbf16>
    %cst = arith.constant dense<0.000000e+00> : vector<16x256xf32>
    %32 = tpu.matmul %31, %30, %cst {dimension_numbers = #tpu.dot_dimension_numbers<[1], [0], [0], [1], [0, 0, 1, 1], [], []>} : vector<16x200xbf16>, vector<200x256xbf16>, vector<16x256xf32> -> vector<16x256xf32>
    %c0_6 = arith.constant 0 : index
    %c0_7 = arith.constant 0 : index
    %33 = vector.load %arg4[%c0_6, %c0_7] : memref<16x1xf32, #tpu.memory_space<vmem>>, vector<16x1xf32>
    %34 = vector.broadcast %33 : vector<16x1xf32> to vector<16x256xf32>
    %35 = arith.addf %32, %34 : vector<16x256xf32>
    %cst_8 = arith.constant 5.000000e-01 : f32
    %36 = vector.broadcast %cst_8 : f32 to vector<16x256xf32>
    %37 = arith.mulf %36, %35 : vector<16x256xf32>
    %cst_9 = arith.constant 0.707106769 : f32
    %38 = vector.broadcast %cst_9 : f32 to vector<16x256xf32>
    %39 = arith.mulf %35, %38 : vector<16x256xf32>
    %40 = math.erf %39 : vector<16x256xf32>
    %cst_10 = arith.constant 1.000000e+00 : f32
    %41 = vector.broadcast %cst_10 : f32 to vector<16x256xf32>
    %42 = arith.addf %41, %40 : vector<16x256xf32>
    %43 = arith.mulf %37, %42 : vector<16x256xf32>
    %44 = vector.broadcast %2 : vector<1x256xf32> to vector<16x256xf32>
    %45 = arith.mulf %43, %44 : vector<16x256xf32>
    %46 = arith.truncf %45 : vector<16x256xf32> to vector<16x256xbf16>
    %47 = vector.extract_strided_slice %46 {offsets = [0, 0], sizes = [16, 128], strides = [1, 1]} : vector<16x256xbf16> to vector<16x128xbf16>
    %48 = vector.extract_strided_slice %46 {offsets = [0, 1], sizes = [16, 128], strides = [1, 1]} : vector<16x256xbf16> to vector<16x128xbf16>
    %49 = vector.extract_strided_slice %46 {offsets = [0, 2], sizes = [16, 128], strides = [1, 1]} : vector<16x256xbf16> to vector<16x128xbf16>
    %50 = vector.extract_strided_slice %46 {offsets = [0, 3], sizes = [16, 128], strides = [1, 1]} : vector<16x256xbf16> to vector<16x128xbf16>
    %51 = vector.extract_strided_slice %46 {offsets = [0, 4], sizes = [16, 128], strides = [1, 1]} : vector<16x256xbf16> to vector<16x128xbf16>
    %52 = vector.extract_strided_slice %46 {offsets = [0, 12], sizes = [16, 128], strides = [1, 1]} : vector<16x256xbf16> to vector<16x128xbf16>
    %53 = vector.extract_strided_slice %46 {offsets = [0, 13], sizes = [16, 128], strides = [1, 1]} : vector<16x256xbf16> to vector<16x128xbf16>
    %54 = vector.extract_strided_slice %46 {offsets = [0, 14], sizes = [16, 128], strides = [1, 1]} : vector<16x256xbf16> to vector<16x128xbf16>
    %55 = vector.extract_strided_slice %46 {offsets = [0, 15], sizes = [16, 128], strides = [1, 1]} : vector<16x256xbf16> to vector<16x128xbf16>
    %56 = vector.extract_strided_slice %46 {offsets = [0, 16], sizes = [16, 128], strides = [1, 1]} : vector<16x256xbf16> to vector<16x128xbf16>
    %57 = vector.extract_strided_slice %46 {offsets = [0, 24], sizes = [16, 128], strides = [1, 1]} : vector<16x256xbf16> to vector<16x128xbf16>
    %58 = vector.extract_strided_slice %46 {offsets = [0, 25], sizes = [16, 128], strides = [1, 1]} : vector<16x256xbf16> to vector<16x128xbf16>
    %59 = vector.extract_strided_slice %46 {offsets = [0, 26], sizes = [16, 128], strides = [1, 1]} : vector<16x256xbf16> to vector<16x128xbf16>
    %60 = vector.extract_strided_slice %46 {offsets = [0, 27], sizes = [16, 128], strides = [1, 1]} : vector<16x256xbf16> to vector<16x128xbf16>
    %61 = vector.extract_strided_slice %46 {offsets = [0, 28], sizes = [16, 128], strides = [1, 1]} : vector<16x256xbf16> to vector<16x128xbf16>
    %62 = vector.extract_strided_slice %46 {offsets = [0, 36], sizes = [16, 128], strides = [1, 1]} : vector<16x256xbf16> to vector<16x128xbf16>
    %63 = vector.extract_strided_slice %46 {offsets = [0, 37], sizes = [16, 128], strides = [1, 1]} : vector<16x256xbf16> to vector<16x128xbf16>
    %64 = vector.extract_strided_slice %46 {offsets = [0, 38], sizes = [16, 128], strides = [1, 1]} : vector<16x256xbf16> to vector<16x128xbf16>
    %65 = vector.extract_strided_slice %46 {offsets = [0, 39], sizes = [16, 128], strides = [1, 1]} : vector<16x256xbf16> to vector<16x128xbf16>
    %66 = vector.extract_strided_slice %46 {offsets = [0, 40], sizes = [16, 128], strides = [1, 1]} : vector<16x256xbf16> to vector<16x128xbf16>
    %67 = vector.extract_strided_slice %46 {offsets = [0, 48], sizes = [16, 128], strides = [1, 1]} : vector<16x256xbf16> to vector<16x128xbf16>
    %68 = vector.extract_strided_slice %46 {offsets = [0, 49], sizes = [16, 128], strides = [1, 1]} : vector<16x256xbf16> to vector<16x128xbf16>
    %69 = vector.extract_strided_slice %46 {offsets = [0, 50], sizes = [16, 128], strides = [1, 1]} : vector<16x256xbf16> to vector<16x128xbf16>
    %70 = vector.extract_strided_slice %46 {offsets = [0, 51], sizes = [16, 128], strides = [1, 1]} : vector<16x256xbf16> to vector<16x128xbf16>
    %71 = vector.extract_strided_slice %46 {offsets = [0, 52], sizes = [16, 128], strides = [1, 1]} : vector<16x256xbf16> to vector<16x128xbf16>
    %72 = tpu.concatenate %47, %48, %49, %50, %51, %52, %53, %54, %55, %56, %57, %58, %59, %60, %61, %62 in 0 : vector<16x128xbf16>, vector<16x128xbf16>, vector<16x128xbf16>, vector<16x128xbf16>, vector<16x128xbf16>, vector<16x128xbf16>, vector<16x128xbf16>, vector<16x128xbf16>, vector<16x128xbf16>, vector<16x128xbf16>, vector<16x128xbf16>, vector<16x128xbf16>, vector<16x128xbf16>, vector<16x128xbf16>, vector<16x128xbf16>, vector<16x128xbf16> -> vector<256x128xbf16>
    %73 = tpu.concatenate %63, %64, %65, %66, %67, %68, %69, %70, %71 in 0 : vector<16x128xbf16>, vector<16x128xbf16>, vector<16x128xbf16>, vector<16x128xbf16>, vector<16x128xbf16>, vector<16x128xbf16>, vector<16x128xbf16>, vector<16x128xbf16>, vector<16x128xbf16> -> vector<144x128xbf16>
    %74 = tpu.concatenate %72, %73 in 0 : vector<256x128xbf16>, vector<144x128xbf16> -> vector<400x128xbf16>
    %c0_11 = arith.constant 0 : index
    %c0_12 = arith.constant 0 : index
    %75 = vector.load %arg5[%c0_11, %c0_12] : memref<8x400xbf16, #tpu.memory_space<vmem>>, vector<8x400xbf16>
    %cst_13 = arith.constant dense<0.000000e+00> : vector<8x128xf32>
    %76 = tpu.matmul %75, %74, %cst_13 {dimension_numbers = #tpu.dot_dimension_numbers<[1], [0], [0], [1], [0, 0, 1, 1], [], []>} : vector<8x400xbf16>, vector<400x128xbf16>, vector<8x128xf32> -> vector<8x128xf32>
    %c0_14 = arith.constant 0 : index
    %c0_15 = arith.constant 0 : index
    %77 = vector.load %arg6[%c0_14, %c0_15] : memref<8x1xf32, #tpu.memory_space<vmem>>, vector<8x1xf32>
    %78 = vector.broadcast %77 : vector<8x1xf32> to vector<8x128xf32>
    %79 = arith.addf %76, %78 : vector<8x128xf32>
    %c0_16 = arith.constant 0 : index
    %c0_17 = arith.constant 0 : index
    %c0_18 = arith.constant 0 : index
    %80 = vector.load %arg7[%c0_16, %c0_17, %c0_18] : memref<1x8x128xf32, #tpu.memory_space<vmem>>, vector<1x8x128xf32>
    %81 = vector.shape_cast %80 : vector<1x8x128xf32> to vector<8x128xf32>
    %82 = vector.shape_cast %79 : vector<8x128xf32> to vector<1x8x128xf32>
    tpu.vector_store %arg7[%c0_16, %c0_17, %c0_18], %82 {strides = array<i32>} : memref<1x8x128xf32, #tpu.memory_space<vmem>>, vector<1x8x128xf32>,
    return
  }
  func.func @transform_0(%arg0: i32) -> (i32, i32, i32) {
    %c0_i32 = arith.constant 0 : i32
    %c0_i32_0 = arith.constant 0 : i32
    %c0_i32_1 = arith.constant 0 : i32
    return %arg0, %c0_i32, %c0_i32_0 : i32, i32, i32
  }
  func.func @transform_1(%arg0: i32) -> (i32, i32) {
    %c0_i32 = arith.constant 0 : i32
    %c0_i32_0 = arith.constant 0 : i32
    %c0_i32_1 = arith.constant 0 : i32
    return %c0_i32, %c0_i32_0 : i32, i32
  }
  func.func @transform_2(%arg0: i32) -> (i32, i32) {
    %c0_i32 = arith.constant 0 : i32
    %c0_i32_0 = arith.constant 0 : i32
    %c0_i32_1 = arith.constant 0 : i32
    return %c0_i32, %c0_i32_0 : i32, i32
  }
  func.func @transform_3(%arg0: i32) -> (i32, i32) {
    %c0_i32 = arith.constant 0 : i32
    %c0_i32_0 = arith.constant 0 : i32
    %c0_i32_1 = arith.constant 0 : i32
    return %c0_i32, %c0_i32_0 : i32, i32
  }
  func.func @transform_4(%arg0: i32) -> (i32, i32) {
    %c0_i32 = arith.constant 0 : i32
    %c0_i32_0 = arith.constant 0 : i32
    %c0_i32_1 = arith.constant 0 : i32
    return %c0_i32, %c0_i32_0 : i32, i32
  }
  func.func @transform_5(%arg0: i32) -> (i32, i32) {
    %c0_i32 = arith.constant 0 : i32
    %c0_i32_0 = arith.constant 0 : i32
    %c0_i32_1 = arith.constant 0 : i32
    return %c0_i32, %c0_i32_0 : i32, i32
  }
  func.func @transform_6(%arg0: i32) -> (i32, i32, i32) {
    %c0_i32 = arith.constant 0 : i32
    %c0_i32_0 = arith.constant 0 : i32
    %c0_i32_1 = arith.constant 0 : i32
    return %arg0, %c0_i32, %c0_i32_0 : i32, i32, i32
  }
}

module attributes {stable_mosaic.version = 11 : i64} {
  func.func @kernel(%arg0: i32, %arg1: memref<1x8x292xbf16, #tpu.memory_space<vmem>>, %arg2: memref<1x256xf32, #tpu.memory_space<vmem>>, %arg3: memref<16x200xbf16, #tpu.memory_space<vmem>>, %arg4: memref<16x1xf32, #tpu.memory_space<vmem>>, %arg5: memref<8x400xbf16, #tpu.memory_space<vmem>>, %arg6: memref<8x1xf32, #tpu.memory_space<vmem>>, %arg7: memref<1x8x128xf32, #tpu.memory_space<vmem>>) attributes {dimension_semantics = [#tpu.dimension_semantics<parallel>], iteration_bounds = array<i64: 2>, scalar_prefetch = 0 : i64, scratch_operands = 0 : i64, tpu.core_type = #tpu.core_type<tc>, window_params = [{transform_indices = @transform_0, window_bounds = array<i64: 1, 8, 292>}, {pipeline_mode = #tpu.pipeline_mode<synchronous>, transform_indices = @transform_1, window_bounds = array<i64: 1, 256>}, {pipeline_mode = #tpu.pipeline_mode<synchronous>, transform_indices = @transform_2, window_bounds = array<i64: 16, 200>}, {pipeline_mode = #tpu.pipeline_mode<synchronous>, transform_indices = @transform_3, window_bounds = array<i64: 16, 1>}, {pipeline_mode = #tpu.pipeline_mode<synchronous>, transform_indices = @transform_4, window_bounds = array<i64: 8, 400>}, {pipeline_mode = #tpu.pipeline_mode<synchronous>, transform_indices = @transform_5, window_bounds = array<i64: 8, 1>}, {transform_indices = @transform_6, window_bounds = array<i64: 1, 8, 128>}]} {
    %c0 = arith.constant 0 : index
    %c0_0 = arith.constant 0 : index
    %c0_1 = arith.constant 0 : index
    %0 = vector.load %arg1[%c0, %c0_0, %c0_1] : memref<1x8x292xbf16, #tpu.memory_space<vmem>>, vector<1x8x292xbf16>
    %1 = vector.shape_cast %0 : vector<1x8x292xbf16> to vector<8x292xbf16>
    %c0_2 = arith.constant 0 : index
    %c0_3 = arith.constant 0 : index
    %2 = vector.load %arg2[%c0_2, %c0_3] : memref<1x256xf32, #tpu.memory_space<vmem>>, vector<1x256xf32>
    %3 = vector.extract_strided_slice %1 {offsets = [0, 0], sizes = [8, 256], strides = [1, 1]} : vector<8x292xbf16> to vector<8x256xbf16>
    %4 = vector.extract_strided_slice %1 {offsets = [0, 1], sizes = [8, 256], strides = [1, 1]} : vector<8x292xbf16> to vector<8x256xbf16>
    %5 = vector.extract_strided_slice %1 {offsets = [0, 2], sizes = [8, 256], strides = [1, 1]} : vector<8x292xbf16> to vector<8x256xbf16>
    %6 = vector.extract_strided_slice %1 {offsets = [0, 3], sizes = [8, 256], strides = [1, 1]} : vector<8x292xbf16> to vector<8x256xbf16>
    %7 = vector.extract_strided_slice %1 {offsets = [0, 4], sizes = [8, 256], strides = [1, 1]} : vector<8x292xbf16> to vector<8x256xbf16>
    %8 = vector.extract_strided_slice %1 {offsets = [0, 8], sizes = [8, 256], strides = [1, 1]} : vector<8x292xbf16> to vector<8x256xbf16>
    %9 = vector.extract_strided_slice %1 {offsets = [0, 9], sizes = [8, 256], strides = [1, 1]} : vector<8x292xbf16> to vector<8x256xbf16>
    %10 = vector.extract_strided_slice %1 {offsets = [0, 10], sizes = [8, 256], strides = [1, 1]} : vector<8x292xbf16> to vector<8x256xbf16>
    %11 = vector.extract_strided_slice %1 {offsets = [0, 11], sizes = [8, 256], strides = [1, 1]} : vector<8x292xbf16> to vector<8x256xbf16>
    %12 = vector.extract_strided_slice %1 {offsets = [0, 12], sizes = [8, 256], strides = [1, 1]} : vector<8x292xbf16> to vector<8x256xbf16>
    %13 = vector.extract_strided_slice %1 {offsets = [0, 16], sizes = [8, 256], strides = [1, 1]} : vector<8x292xbf16> to vector<8x256xbf16>
    %14 = vector.extract_strided_slice %1 {offsets = [0, 17], sizes = [8, 256], strides = [1, 1]} : vector<8x292xbf16> to vector<8x256xbf16>
    %15 = vector.extract_strided_slice %1 {offsets = [0, 18], sizes = [8, 256], strides = [1, 1]} : vector<8x292xbf16> to vector<8x256xbf16>
    %16 = vector.extract_strided_slice %1 {offsets = [0, 19], sizes = [8, 256], strides = [1, 1]} : vector<8x292xbf16> to vector<8x256xbf16>
    %17 = vector.extract_strided_slice %1 {offsets = [0, 20], sizes = [8, 256], strides = [1, 1]} : vector<8x292xbf16> to vector<8x256xbf16>
    %18 = vector.extract_strided_slice %1 {offsets = [0, 24], sizes = [8, 256], strides = [1, 1]} : vector<8x292xbf16> to vector<8x256xbf16>
    %19 = vector.extract_strided_slice %1 {offsets = [0, 25], sizes = [8, 256], strides = [1, 1]} : vector<8x292xbf16> to vector<8x256xbf16>
    %20 = vector.extract_strided_slice %1 {offsets = [0, 26], sizes = [8, 256], strides = [1, 1]} : vector<8x292xbf16> to vector<8x256xbf16>
    %21 = vector.extract_strided_slice %1 {offsets = [0, 27], sizes = [8, 256], strides = [1, 1]} : vector<8x292xbf16> to vector<8x256xbf16>
    %22 = vector.extract_strided_slice %1 {offsets = [0, 28], sizes = [8, 256], strides = [1, 1]} : vector<8x292xbf16> to vector<8x256xbf16>
    %23 = vector.extract_strided_slice %1 {offsets = [0, 32], sizes = [8, 256], strides = [1, 1]} : vector<8x292xbf16> to vector<8x256xbf16>
    %24 = vector.extract_strided_slice %1 {offsets = [0, 33], sizes = [8, 256], strides = [1, 1]} : vector<8x292xbf16> to vector<8x256xbf16>
    %25 = vector.extract_strided_slice %1 {offsets = [0, 34], sizes = [8, 256], strides = [1, 1]} : vector<8x292xbf16> to vector<8x256xbf16>
    %26 = vector.extract_strided_slice %1 {offsets = [0, 35], sizes = [8, 256], strides = [1, 1]} : vector<8x292xbf16> to vector<8x256xbf16>
    %27 = vector.extract_strided_slice %1 {offsets = [0, 36], sizes = [8, 256], strides = [1, 1]} : vector<8x292xbf16> to vector<8x256xbf16>
    %28 = tpu.concatenate %3, %4, %5, %6, %7, %8, %9, %10, %11, %12, %13, %14, %15, %16, %17, %18 in 0 : vector<8x256xbf16>, vector<8x256xbf16>, vector<8x256xbf16>, vector<8x256xbf16>, vector<8x256xbf16>, vector<8x256xbf16>, vector<8x256xbf16>, vector<8x256xbf16>, vector<8x256xbf16>, vector<8x256xbf16>, vector<8x256xbf16>, vector<8x256xbf16>, vector<8x256xbf16>, vector<8x256xbf16>, vector<8x256xbf16>, vector<8x256xbf16> -> vector<128x256xbf16>
    %29 = tpu.concatenate %19, %20, %21, %22, %23, %24, %25, %26, %27 in 0 : vector<8x256xbf16>, vector<8x256xbf16>, vector<8x256xbf16>, vector<8x256xbf16>, vector<8x256xbf16>, vector<8x256xbf16>, vector<8x256xbf16>, vector<8x256xbf16>, vector<8x256xbf16> -> vector<72x256xbf16>
    %30 = tpu.concatenate %28, %29 in 0 : vector<128x256xbf16>, vector<72x256xbf16> -> vector<200x256xbf16>
    %c0_4 = arith.constant 0 : index
    %c0_5 = arith.constant 0 : index
    %31 = vector.load %arg3[%c0_4, %c0_5] : memref<16x200xbf16, #tpu.memory_space<vmem>>, vector<16x200xbf16>
    %cst = arith.constant dense<0.000000e+00> : vector<16x256xf32>
    %32 = tpu.matmul %31, %30, %cst {dimension_numbers = #tpu.dot_dimension_numbers<[1], [0], [0], [1], [0, 0, 1, 1], [], []>} : vector<16x200xbf16>, vector<200x256xbf16>, vector<16x256xf32> -> vector<16x256xf32>
    %c0_6 = arith.constant 0 : index
    %c0_7 = arith.constant 0 : index
    %33 = vector.load %arg4[%c0_6, %c0_7] : memref<16x1xf32, #tpu.memory_space<vmem>>, vector<16x1xf32>
    %34 = vector.broadcast %33 : vector<16x1xf32> to vector<16x256xf32>
    %35 = arith.addf %32, %34 : vector<16x256xf32>
    %cst_8 = arith.constant 5.000000e-01 : f32
    %36 = vector.broadcast %cst_8 : f32 to vector<16x256xf32>
    %37 = arith.mulf %36, %35 : vector<16x256xf32>
    %cst_9 = arith.constant 0.707106769 : f32
    %38 = vector.broadcast %cst_9 : f32 to vector<16x256xf32>
    %39 = arith.mulf %35, %38 : vector<16x256xf32>
    %40 = math.erf %39 : vector<16x256xf32>
    %cst_10 = arith.constant 1.000000e+00 : f32
    %41 = vector.broadcast %cst_10 : f32 to vector<16x256xf32>
    %42 = arith.addf %41, %40 : vector<16x256xf32>
    %43 = arith.mulf %37, %42 : vector<16x256xf32>
    %44 = vector.broadcast %2 : vector<1x256xf32> to vector<16x256xf32>
    %45 = arith.mulf %43, %44 : vector<16x256xf32>
    %46 = arith.truncf %45 : vector<16x256xf32> to vector<16x256xbf16>
    %47 = vector.extract_strided_slice %46 {offsets = [0, 0], sizes = [16, 128], strides = [1, 1]} : vector<16x256xbf16> to vector<16x128xbf16>
    %48 = vector.extract_strided_slice %46 {offsets = [0, 1], sizes = [16, 128], strides = [1, 1]} : vector<16x256xbf16> to vector<16x128xbf16>
    %49 = vector.extract_strided_slice %46 {offsets = [0, 2], sizes = [16, 128], strides = [1, 1]} : vector<16x256xbf16> to vector<16x128xbf16>
    %50 = vector.extract_strided_slice %46 {offsets = [0, 3], sizes = [16, 128], strides = [1, 1]} : vector<16x256xbf16> to vector<16x128xbf16>
    %51 = vector.extract_strided_slice %46 {offsets = [0, 4], sizes = [16, 128], strides = [1, 1]} : vector<16x256xbf16> to vector<16x128xbf16>
    %52 = vector.extract_strided_slice %46 {offsets = [0, 8], sizes = [16, 128], strides = [1, 1]} : vector<16x256xbf16> to vector<16x128xbf16>
    %53 = vector.extract_strided_slice %46 {offsets = [0, 9], sizes = [16, 128], strides = [1, 1]} : vector<16x256xbf16> to vector<16x128xbf16>
    %54 = vector.extract_strided_slice %46 {offsets = [0, 10], sizes = [16, 128], strides = [1, 1]} : vector<16x256xbf16> to vector<16x128xbf16>
    %55 = vector.extract_strided_slice %46 {offsets = [0, 11], sizes = [16, 128], strides = [1, 1]} : vector<16x256xbf16> to vector<16x128xbf16>
    %56 = vector.extract_strided_slice %46 {offsets = [0, 12], sizes = [16, 128], strides = [1, 1]} : vector<16x256xbf16> to vector<16x128xbf16>
    %57 = vector.extract_strided_slice %46 {offsets = [0, 16], sizes = [16, 128], strides = [1, 1]} : vector<16x256xbf16> to vector<16x128xbf16>
    %58 = vector.extract_strided_slice %46 {offsets = [0, 17], sizes = [16, 128], strides = [1, 1]} : vector<16x256xbf16> to vector<16x128xbf16>
    %59 = vector.extract_strided_slice %46 {offsets = [0, 18], sizes = [16, 128], strides = [1, 1]} : vector<16x256xbf16> to vector<16x128xbf16>
    %60 = vector.extract_strided_slice %46 {offsets = [0, 19], sizes = [16, 128], strides = [1, 1]} : vector<16x256xbf16> to vector<16x128xbf16>
    %61 = vector.extract_strided_slice %46 {offsets = [0, 20], sizes = [16, 128], strides = [1, 1]} : vector<16x256xbf16> to vector<16x128xbf16>
    %62 = vector.extract_strided_slice %46 {offsets = [0, 24], sizes = [16, 128], strides = [1, 1]} : vector<16x256xbf16> to vector<16x128xbf16>
    %63 = vector.extract_strided_slice %46 {offsets = [0, 25], sizes = [16, 128], strides = [1, 1]} : vector<16x256xbf16> to vector<16x128xbf16>
    %64 = vector.extract_strided_slice %46 {offsets = [0, 26], sizes = [16, 128], strides = [1, 1]} : vector<16x256xbf16> to vector<16x128xbf16>
    %65 = vector.extract_strided_slice %46 {offsets = [0, 27], sizes = [16, 128], strides = [1, 1]} : vector<16x256xbf16> to vector<16x128xbf16>
    %66 = vector.extract_strided_slice %46 {offsets = [0, 28], sizes = [16, 128], strides = [1, 1]} : vector<16x256xbf16> to vector<16x128xbf16>
    %67 = vector.extract_strided_slice %46 {offsets = [0, 32], sizes = [16, 128], strides = [1, 1]} : vector<16x256xbf16> to vector<16x128xbf16>
    %68 = vector.extract_strided_slice %46 {offsets = [0, 33], sizes = [16, 128], strides = [1, 1]} : vector<16x256xbf16> to vector<16x128xbf16>
    %69 = vector.extract_strided_slice %46 {offsets = [0, 34], sizes = [16, 128], strides = [1, 1]} : vector<16x256xbf16> to vector<16x128xbf16>
    %70 = vector.extract_strided_slice %46 {offsets = [0, 35], sizes = [16, 128], strides = [1, 1]} : vector<16x256xbf16> to vector<16x128xbf16>
    %71 = vector.extract_strided_slice %46 {offsets = [0, 36], sizes = [16, 128], strides = [1, 1]} : vector<16x256xbf16> to vector<16x128xbf16>
    %72 = tpu.concatenate %47, %48, %49, %50, %51, %52, %53, %54, %55, %56, %57, %58, %59, %60, %61, %62 in 0 : vector<16x128xbf16>, vector<16x128xbf16>, vector<16x128xbf16>, vector<16x128xbf16>, vector<16x128xbf16>, vector<16x128xbf16>, vector<16x128xbf16>, vector<16x128xbf16>, vector<16x128xbf16>, vector<16x128xbf16>, vector<16x128xbf16>, vector<16x128xbf16>, vector<16x128xbf16>, vector<16x128xbf16>, vector<16x128xbf16>, vector<16x128xbf16> -> vector<256x128xbf16>
    %73 = tpu.concatenate %63, %64, %65, %66, %67, %68, %69, %70, %71 in 0 : vector<16x128xbf16>, vector<16x128xbf16>, vector<16x128xbf16>, vector<16x128xbf16>, vector<16x128xbf16>, vector<16x128xbf16>, vector<16x128xbf16>, vector<16x128xbf16>, vector<16x128xbf16> -> vector<144x128xbf16>
    %74 = tpu.concatenate %72, %73 in 0 : vector<256x128xbf16>, vector<144x128xbf16> -> vector<400x128xbf16>
    %c0_11 = arith.constant 0 : index
    %c0_12 = arith.constant 0 : index
    %75 = vector.load %arg5[%c0_11, %c0_12] : memref<8x400xbf16, #tpu.memory_space<vmem>>, vector<8x400xbf16>
    %cst_13 = arith.constant dense<0.000000e+00> : vector<8x128xf32>
    %76 = tpu.matmul %75, %74, %cst_13 {dimension_numbers = #tpu.dot_dimension_numbers<[1], [0], [0], [1], [0, 0, 1, 1], [], []>} : vector<8x400xbf16>, vector<400x128xbf16>, vector<8x128xf32> -> vector<8x128xf32>
    %c0_14 = arith.constant 0 : index
    %c0_15 = arith.constant 0 : index
    %77 = vector.load %arg6[%c0_14, %c0_15] : memref<8x1xf32, #tpu.memory_space<vmem>>, vector<8x1xf32>
    %78 = vector.broadcast %77 : vector<8x1xf32> to vector<8x128xf32>
    %79 = arith.addf %76, %78 : vector<8x128xf32>
    %c0_16 = arith.constant 0 : index
    %c0_17 = arith.constant 0 : index
    %c0_18 = arith.constant 0 : index
    %80 = vector.load %arg7[%c0_16, %c0_17, %c0_18] : memref<1x8x128xf32, #tpu.memory_space<vmem>>, vector<1x8x128xf32>
    %81 = vector.shape_cast %80 : vector<1x8x128xf32> to vector<8x128xf32>
    %82 = vector.shape_cast %79 : vector<8x128xf32> to vector<1x8x128xf32>
    tpu.vector_store %arg7[%c0_16, %c0_17, %c0_18], %82 {strides = array<i32>} : memref<1x8x128xf32, #tpu.memory_space<vmem>>, vector<1x8x128xf32>,
    return
  }
  func.func @transform_0(%arg0: i32) -> (i32, i32, i32) {
    %c0_i32 = arith.constant 0 : i32
    %c0_i32_0 = arith.constant 0 : i32
    %c0_i32_1 = arith.constant 0 : i32
    return %arg0, %c0_i32, %c0_i32_0 : i32, i32, i32
  }
  func.func @transform_1(%arg0: i32) -> (i32, i32) {
    %c0_i32 = arith.constant 0 : i32
    %c0_i32_0 = arith.constant 0 : i32
    %c0_i32_1 = arith.constant 0 : i32
    return %c0_i32, %c0_i32_0 : i32, i32
  }
  func.func @transform_2(%arg0: i32) -> (i32, i32) {
    %c0_i32 = arith.constant 0 : i32
    %c0_i32_0 = arith.constant 0 : i32
    %c0_i32_1 = arith.constant 0 : i32
    return %c0_i32, %c0_i32_0 : i32, i32
  }
  func.func @transform_3(%arg0: i32) -> (i32, i32) {
    %c0_i32 = arith.constant 0 : i32
    %c0_i32_0 = arith.constant 0 : i32
    %c0_i32_1 = arith.constant 0 : i32
    return %c0_i32, %c0_i32_0 : i32, i32
  }
  func.func @transform_4(%arg0: i32) -> (i32, i32) {
    %c0_i32 = arith.constant 0 : i32
    %c0_i32_0 = arith.constant 0 : i32
    %c0_i32_1 = arith.constant 0 : i32
    return %c0_i32, %c0_i32_0 : i32, i32
  }
  func.func @transform_5(%arg0: i32) -> (i32, i32) {
    %c0_i32 = arith.constant 0 : i32
    %c0_i32_0 = arith.constant 0 : i32
    %c0_i32_1 = arith.constant 0 : i32
    return %c0_i32, %c0_i32_0 : i32, i32
  }
  func.func @transform_6(%arg0: i32) -> (i32, i32, i32) {
    %c0_i32 = arith.constant 0 : i32
    %c0_i32_0 = arith.constant 0 : i32
    %c0_i32_1 = arith.constant 0 : i32
    return %arg0, %c0_i32, %c0_i32_0 : i32, i32, i32
  }
}

module attributes {stable_mosaic.version = 11 : i64} {
  func.func @kernel(%arg0: i32, %arg1: memref<2x2xf32, #tpu.memory_space<vmem>>, %arg2: memref<2x128xf32, #tpu.memory_space<vmem>>, %arg3: memref<2x128xf32, #tpu.memory_space<vmem>>, %arg4: memref<2x128xf32, #tpu.memory_space<vmem>>, %arg5: memref<2x128xf32, #tpu.memory_space<vmem>>) attributes {dimension_semantics = [#tpu.dimension_semantics<parallel>], iteration_bounds = array<i64: 1>, scalar_prefetch = 0 : i64, scratch_operands = 0 : i64, tpu.core_type = #tpu.core_type<tc>, window_params = [{transform_indices = @transform_0, window_bounds = array<i64: 2, 2>}, {transform_indices = @transform_1, window_bounds = array<i64: 2, 128>}, {transform_indices = @transform_2, window_bounds = array<i64: 2, 128>}, {transform_indices = @transform_3, window_bounds = array<i64: 2, 128>}, {transform_indices = @transform_4, window_bounds = array<i64: 2, 128>}]} {
    %c0 = arith.constant 0 : index
    %c0_0 = arith.constant 0 : index
    %0 = vector.load %arg1[%c0, %c0_0] : memref<2x2xf32, #tpu.memory_space<vmem>>, vector<2x2xf32>
    %c0_1 = arith.constant 0 : index
    %c0_2 = arith.constant 0 : index
    %1 = vector.load %arg2[%c0_1, %c0_2] : memref<2x128xf32, #tpu.memory_space<vmem>>, vector<2x128xf32>
    %c0_3 = arith.constant 0 : index
    %c0_4 = arith.constant 0 : index
    %2 = vector.load %arg3[%c0_3, %c0_4] : memref<2x128xf32, #tpu.memory_space<vmem>>, vector<2x128xf32>
    %3 = vector.extract_strided_slice %0 {offsets = [0, 0], sizes = [2, 1], strides = [1, 1]} : vector<2x2xf32> to vector<2x1xf32>
    %4 = vector.broadcast %3 : vector<2x1xf32> to vector<2x128xf32>
    %5 = arith.mulf %2, %4 : vector<2x128xf32>
    %6 = arith.addf %1, %5 : vector<2x128xf32>
    %c0_5 = arith.constant 0 : index
    %c0_6 = arith.constant 0 : index
    %7 = vector.load %arg4[%c0_5, %c0_6] : memref<2x128xf32, #tpu.memory_space<vmem>>, vector<2x128xf32>
    %8 = vector.extract_strided_slice %0 {offsets = [0, 1], sizes = [2, 1], strides = [1, 1]} : vector<2x2xf32> to vector<2x1xf32>
    %9 = vector.broadcast %8 : vector<2x1xf32> to vector<2x128xf32>
    %10 = arith.mulf %7, %9 : vector<2x128xf32>
    %11 = arith.addf %6, %10 : vector<2x128xf32>
    %c0_7 = arith.constant 0 : index
    %c0_8 = arith.constant 0 : index
    %12 = vector.load %arg5[%c0_7, %c0_8] : memref<2x128xf32, #tpu.memory_space<vmem>>, vector<2x128xf32>
    tpu.vector_store %arg5[%c0_7, %c0_8], %11 {strides = array<i32>} : memref<2x128xf32, #tpu.memory_space<vmem>>, vector<2x128xf32>,
    return
  }
  func.func @transform_0(%arg0: i32) -> (i32, i32) {
    %c0_i32 = arith.constant 0 : i32
    %c0_i32_0 = arith.constant 0 : i32
    return %arg0, %c0_i32 : i32, i32
  }
  func.func @transform_1(%arg0: i32) -> (i32, i32) {
    %c0_i32 = arith.constant 0 : i32
    %c0_i32_0 = arith.constant 0 : i32
    return %arg0, %c0_i32 : i32, i32
  }
  func.func @transform_2(%arg0: i32) -> (i32, i32) {
    %c0_i32 = arith.constant 0 : i32
    %c0_i32_0 = arith.constant 0 : i32
    return %arg0, %c0_i32 : i32, i32
  }
  func.func @transform_3(%arg0: i32) -> (i32, i32) {
    %c0_i32 = arith.constant 0 : i32
    %c0_i32_0 = arith.constant 0 : i32
    return %arg0, %c0_i32 : i32, i32
  }
  func.func @transform_4(%arg0: i32) -> (i32, i32) {
    %c0_i32 = arith.constant 0 : i32
    %c0_i32_0 = arith.constant 0 : i32
    return %arg0, %c0_i32 : i32, i32
  }
}

</mosaic_0001>

<llo_original>
// kernel: _times_block_body.5
$region0: #{_times_block_body.5}
  #allocation0 [shape = 'u32[]', space=smem, size = 0x4, offset = 0x4, fixed_abs, tag = 'smem constant byte address 0x4 - core index']
  #allocation1 [shape = 'u32[144,128]{1,0:T(1,128)}', space=vmem, size = 0x12000, scoped, tag = 'internal scratch']
  %s0 = inlined_call_operand.vmem [shape: f32[2,2], index: 0, kind: input, shape index: {}]
  %s1 = inlined_call_operand.vmem [shape: f32[2,128], index: 1, kind: input, shape index: {}]
  %s2 = inlined_call_operand.vmem [shape: f32[2,128], index: 2, kind: input, shape index: {}]
  %s3 = inlined_call_operand.vmem [shape: f32[2,128], index: 3, kind: input, shape index: {}]
  %s4 = inlined_call_operand.vmem [shape: f32[2,128], index: 4, kind: output, shape index: {}]
  %s5 = sld [smem:[#allocation0]]
  $region26: #{_times_block_body.5} parent=0
    _
  %s7 = ssub.s32 1, %s5
  %s8 = scalar_select 0, %s7, %s5
  // Predicated region
  $region2: #{_times_block_body.5} parent=0 // pred_check
    _
  $region3: #{_times_block_body.5} parent=0 // pred_check_branch
    %10 = sbr.rel (0) target = $region5
  $region4: #{_times_block_body.5} parent=0 // pred_region
    _
  $region5: #{_times_block_body.5} parent=0 // pred_fallthru
    _
  // Predicated region
  $region6: #{_times_block_body.5} parent=0 // pred_check
    _
  $region7: #{_times_block_body.5} parent=0 // pred_check_branch
    %12 = sbr.rel (0) target = $region9
  $region8: #{_times_block_body.5} parent=0 // pred_region
    _
  $region9: #{_times_block_body.5} parent=0 // pred_fallthru
    _
  // Predicated region
  $region10: #{_times_block_body.5} parent=0 // pred_check
    _
  $region11: #{_times_block_body.5} parent=0 // pred_check_branch
    %14 = sbr.rel (0) target = $region13
  $region12: #{_times_block_body.5} parent=0 // pred_region
    _
  $region13: #{_times_block_body.5} parent=0 // pred_fallthru
    _
  // Predicated region
  $region14: #{_times_block_body.5} parent=0 // pred_check
    _
  $region15: #{_times_block_body.5} parent=0 // pred_check_branch
    %16 = sbr.rel (0) target = $region17
  $region16: #{_times_block_body.5} parent=0 // pred_region
    _
  $region17: #{_times_block_body.5} parent=0 // pred_fallthru
    _
  %v17 = vld [vmem:[%s0] sm:$0x3]
  %v18 = vld [vmem:[%s1] sm:$0x3]
  %v19 = vld [vmem:[%s2] sm:$0x3]
  %21 = vset.pattern.permute.xlu0 0
  %22 = vperm.xlu0 %21, %v17
  %v23 = vpop.permute.xlu0 %22
  %v25 = vmul.f32 %v19, %v23
  %v26 = vadd.f32 %v18, %v25
  %v27 = vld [vmem:[%s3] sm:$0x3]
  %28 = vset.pattern.permute.xlu0 1
  %29 = vperm.xlu0 %28, %v17
  %v30 = vpop.permute.xlu0 %29
  %v32 = vmul.f32 %v27, %v30
  %v33 = vadd.f32 %v26, %v32
  %34 = vst [vmem:[%s4] sm:$0x3] %v33
  // Predicated region
  $region18: #{_times_block_body.5} parent=0 // pred_check
    _
  $region19: #{_times_block_body.5} parent=0 // pred_check_branch
    %36 = sbr.rel (0) target = $region21
  $region20: #{_times_block_body.5} parent=0 // pred_region
    _
  $region21: #{_times_block_body.5} parent=0 // pred_fallthru
    _
  // Predicated region
  $region22: #{_times_block_body.5} parent=0 // pred_check
    _
  $region23: #{_times_block_body.5} parent=0 // pred_check_branch
    %38 = sbr.rel (0) target = $region25
  $region24: #{_times_block_body.5} parent=0 // pred_region
    _
  $region25: #{_times_block_body.5} parent=0 // pred_fallthru
    _

// kernel: _times_block_body.4
$region0: #{_times_block_body.4}
  #allocation0 [shape = 'u32[]', space=smem, size = 0x4, offset = 0x4, fixed_abs, tag = 'smem constant byte address 0x4 - core index']
  #allocation1 [shape = 'u32[144,128]{1,0:T(1,128)}', space=vmem, size = 0x12000, scoped, tag = 'internal scratch']
  %s0 = inlined_call_operand.vmem [shape: bf16[2,8,308], index: 0, kind: input, shape index: {}]
  %s1 = inlined_call_operand.vmem [shape: f32[1,256], index: 1, kind: input, shape index: {}]
  %s2 = inlined_call_operand.vmem [shape: bf16[16,200], index: 2, kind: input, shape index: {}]
  %s3 = inlined_call_operand.vmem [shape: f32[16,1], index: 3, kind: input, shape index: {}]
  %s4 = inlined_call_operand.vmem [shape: bf16[8,400], index: 4, kind: input, shape index: {}]
  %s5 = inlined_call_operand.vmem [shape: f32[8,1], index: 5, kind: input, shape index: {}]
  %s6 = inlined_call_operand.vmem [shape: f32[2,8,128], index: 6, kind: output, shape index: {}]
  %s7 = sld [smem:[#allocation0]]
  $region57: #{_times_block_body.4} parent=0
    _
  %s9 = ssub.s32 1, %s7
  %s10 = scalar_select 0, %s9, %s7
  loop: start=0, step=1, limit=4
  $region2: #{_times_block_body.4} parent=0 // loop_pre_header
    _
  $region3: #{_times_block_body.4} parent=0 // loop_header
    %s12 = sphi 0, %s16
    %p13 = scmp.ge.s32.totalorder %s12, 4
    %s22 = sphi 0, %s24
    %s25 = sphi 0, %s22
    %s26 = sphi 0, %s25
    %s42 = sphi 0, %s26
    %s46 = sphi 0, %s46
    %s48 = sphi 0, %s46
    %s49 = sphi 0, %s48
    %s63 = sphi 0, %s49
    %s67 = sphi 0, %s67
    %s69 = sphi 0, %s67
    %s70 = sphi 0, %s69
    %s84 = sphi 0, %s70
    %s88 = sphi 0, %s88
    %s90 = sphi 0, %s88
    %s91 = sphi 0, %s90
    %s105 = sphi 0, %s91
    %s109 = sphi 0, %s109
    %s111 = sphi 0, %s109
    %s112 = sphi 0, %s111
    %s126 = sphi 0, %s112
    %s130 = sphi 0, %s130
    %s132 = sphi 0, %s130
    %s133 = sphi 0, %s132
    %s147 = sphi 0, %s133
    %s153 = sphi 0, %s155
    %s156 = sphi 0, %s153
    %s157 = sphi 0, %s156
    %s173 = sphi 0, %s157
  $region4: #{_times_block_body.4} parent=0 // loop_header_branch
    %15 = sbr.rel (%p13) target = $region8
  $region5: #{_times_block_body.4} parent=0 // loop_body
    %s17 = ssub.s32 %s12, 1
    %s18 = ssub.s32 %s12, 2
    %s19 = sadd.s32 %s12, 1
    %s20 = ssub.s32 %s12, %s19
    %p21 = scmp.eq.s32.totalorder %s20, 0
    %s23 = sadd.s32 %s22, 1
    %s24 = scalar_select %p21, %s22, %s23
    %p27 = pneg %p21
    %p28 = scmp.eq.s32.totalorder %s12, 1
    %p29 = por %p27, %p28
    %p30 = scmp.ne.s32.totalorder %s22, %s25
    %p31 = scmp.eq.s32.totalorder %s12, 0
    %p32 = por %p30, %p31
    %p33 = scmp.ne.s32.totalorder %s22, %s25
    %p34 = scmp.eq.s32.totalorder %s17, 1
    %p35 = por %p33, %p34
    %p36 = scmp.ne.s32.totalorder %s25, %s26
    %p37 = scmp.eq.s32.totalorder %s17, 0
    %p38 = por %p36, %p37
    %p39 = scmp.ne.s32.totalorder %s25, %s26
    %p40 = scmp.eq.s32.totalorder %s18, 1
    %p41 = por %p39, %p40
    %p43 = scmp.ne.s32.totalorder %s26, %s42
    %p44 = scmp.eq.s32.totalorder %s18, 0
    %p45 = por %p43, %p44
    %s47 = sadd.s32 %s46, 1
    %p50 = scmp.eq.s32.totalorder %s12, 1
    %p51 = scmp.ne.s32.totalorder %s46, %s48
    %p52 = scmp.eq.s32.totalorder %s12, 0
    %p53 = por %p51, %p52
    %p54 = scmp.ne.s32.totalorder %s46, %s48
    %p55 = scmp.eq.s32.totalorder %s17, 1
    %p56 = por %p54, %p55
    %p57 = scmp.ne.s32.totalorder %s48, %s49
    %p58 = scmp.eq.s32.totalorder %s17, 0
    %p59 = por %p57, %p58
    %p60 = scmp.ne.s32.totalorder %s48, %s49
    %p61 = scmp.eq.s32.totalorder %s18, 1
    %p62 = por %p60, %p61
    %p64 = scmp.ne.s32.totalorder %s49, %s63
    %p65 = scmp.eq.s32.totalorder %s18, 0
    %p66 = por %p64, %p65
    %s68 = sadd.s32 %s67, 1
    %p71 = scmp.eq.s32.totalorder %s12, 1
    %p72 = scmp.ne.s32.totalorder %s67, %s69
    %p73 = scmp.eq.s32.totalorder %s12, 0
    %p74 = por %p72, %p73
    %p75 = scmp.ne.s32.totalorder %s67, %s69
    %p76 = scmp.eq.s32.totalorder %s17, 1
    %p77 = por %p75, %p76
    %p78 = scmp.ne.s32.totalorder %s69, %s70
    %p79 = scmp.eq.s32.totalorder %s17, 0
    %p80 = por %p78, %p79
    %p81 = scmp.ne.s32.totalorder %s69, %s70
    %p82 = scmp.eq.s32.totalorder %s18, 1
    %p83 = por %p81, %p82
    %p85 = scmp.ne.s32.totalorder %s70, %s84
    %p86 = scmp.eq.s32.totalorder %s18, 0
    %p87 = por %p85, %p86
    %s89 = sadd.s32 %s88, 1
    %p92 = scmp.eq.s32.totalorder %s12, 1
    %p93 = scmp.ne.s32.totalorder %s88, %s90
    %p94 = scmp.eq.s32.totalorder %s12, 0
    %p95 = por %p93, %p94
    %p96 = scmp.ne.s32.totalorder %s88, %s90
    %p97 = scmp.eq.s32.totalorder %s17, 1
    %p98 = por %p96, %p97
    %p99 = scmp.ne.s32.totalorder %s90, %s91
    %p100 = scmp.eq.s32.totalorder %s17, 0
    %p101 = por %p99, %p100
    %p102 = scmp.ne.s32.totalorder %s90, %s91
    %p103 = scmp.eq.s32.totalorder %s18, 1
    %p104 = por %p102, %p103
    %p106 = scmp.ne.s32.totalorder %s91, %s105
    %p107 = scmp.eq.s32.totalorder %s18, 0
    %p108 = por %p106, %p107
    %s110 = sadd.s32 %s109, 1
    %p113 = scmp.eq.s32.totalorder %s12, 1
    %p114 = scmp.ne.s32.totalorder %s109, %s111
    %p115 = scmp.eq.s32.totalorder %s12, 0
    %p116 = por %p114, %p115
    %p117 = scmp.ne.s32.totalorder %s109, %s111
    %p118 = scmp.eq.s32.totalorder %s17, 1
    %p119 = por %p117, %p118
    %p120 = scmp.ne.s32.totalorder %s111, %s112
    %p121 = scmp.eq.s32.totalorder %s17, 0
    %p122 = por %p120, %p121
    %p123 = scmp.ne.s32.totalorder %s111, %s112
    %p124 = scmp.eq.s32.totalorder %s18, 1
    %p125 = por %p123, %p124
    %p127 = scmp.ne.s32.totalorder %s112, %s126
    %p128 = scmp.eq.s32.totalorder %s18, 0
    %p129 = por %p127, %p128
    %s131 = sadd.s32 %s130, 1
    %p134 = scmp.eq.s32.totalorder %s12, 1
    %p135 = scmp.ne.s32.totalorder %s130, %s132
    %p136 = scmp.eq.s32.totalorder %s12, 0
    %p137 = por %p135, %p136
    %p138 = scmp.ne.s32.totalorder %s130, %s132
    %p139 = scmp.eq.s32.totalorder %s17, 1
    %p140 = por %p138, %p139
    %p141 = scmp.ne.s32.totalorder %s132, %s133
    %p142 = scmp.eq.s32.totalorder %s17, 0
    %p143 = por %p141, %p142
    %p144 = scmp.ne.s32.totalorder %s132, %s133
    %p145 = scmp.eq.s32.totalorder %s18, 1
    %p146 = por %p144, %p145
    %p148 = scmp.ne.s32.totalorder %s133, %s147
    %p149 = scmp.eq.s32.totalorder %s18, 0
    %p150 = por %p148, %p149
    %s151 = ssub.s32 %s12, %s19
    %p152 = scmp.eq.s32.totalorder %s151, 0
    %s154 = sadd.s32 %s153, 1
    %s155 = scalar_select %p152, %s153, %s154
    %p158 = pneg %p152
    %p159 = scmp.eq.s32.totalorder %s12, 1
    %p160 = por %p158, %p159
    %p161 = scmp.ne.s32.totalorder %s153, %s156
    %p162 = scmp.eq.s32.totalorder %s12, 0
    %p163 = por %p161, %p162
    %p164 = scmp.ne.s32.totalorder %s153, %s156
    %p165 = scmp.eq.s32.totalorder %s17, 1
    %p166 = por %p164, %p165
    %p167 = scmp.ne.s32.totalorder %s156, %s157
    %p168 = scmp.eq.s32.totalorder %s17, 0
    %p169 = por %p167, %p168
    %p170 = scmp.ne.s32.totalorder %s156, %s157
    %p171 = scmp.eq.s32.totalorder %s18, 1
    %p172 = por %p170, %p171
    %p174 = scmp.ne.s32.totalorder %s157, %s173
    %p175 = scmp.eq.s32.totalorder %s18, 0
    %p176 = por %p174, %p175
    %p177 = scmp.le.s32.totalorder 1, %s12
    %p178 = scmp.lt.s32.totalorder %s12, 3
    %p179 = pnand %p177, %p178
    %p180 = pneg %p179
    // Predicated region
    $region9: #{_times_block_body.4} parent=5 // pred_check
      _
    $region10: #{_times_block_body.4} parent=5 // pred_check_branch
      %182 = sbr.rel (%p179) target = $region12
    $region11: #{_times_block_body.4} parent=5 // pred_region
      %s183 = ssub.s32 %s12, 1
      // Predicated region
      $region13: #{_times_block_body.4} parent=11 // pred_check
        %p184 = pneg %p59
      $region14: #{_times_block_body.4} parent=11 // pred_check_branch
        %186 = sbr.rel (%p184) target = $region16
      $region15: #{_times_block_body.4} parent=11 // pred_region
        _
      $region16: #{_times_block_body.4} parent=11 // pred_fallthru
        _
      // Predicated region
      $region17: #{_times_block_body.4} parent=11 // pred_check
        %p187 = pneg %p80
      $region18: #{_times_block_body.4} parent=11 // pred_check_branch
        %189 = sbr.rel (%p187) target = $region20
      $region19: #{_times_block_body.4} parent=11 // pred_region
        _
      $region20: #{_times_block_body.4} parent=11 // pred_fallthru
        _
      // Predicated region
      $region21: #{_times_block_body.4} parent=11 // pred_check
        %p190 = pneg %p101
      $region22: #{_times_block_body.4} parent=11 // pred_check_branch
        %192 = sbr.rel (%p190) target = $region24
      $region23: #{_times_block_body.4} parent=11 // pred_region
        _
      $region24: #{_times_block_body.4} parent=11 // pred_fallthru
        _
      // Predicated region
      $region25: #{_times_block_body.4} parent=11 // pred_check
        %p193 = pneg %p122
      $region26: #{_times_block_body.4} parent=11 // pred_check_branch
        %195 = sbr.rel (%p193) target = $region28
      $region27: #{_times_block_body.4} parent=11 // pred_region
        _
      $region28: #{_times_block_body.4} parent=11 // pred_fallthru
        _
      // Predicated region
      $region29: #{_times_block_body.4} parent=11 // pred_check
        %p196 = pneg %p143
      $region30: #{_times_block_body.4} parent=11 // pred_check_branch
        %198 = sbr.rel (%p196) target = $region32
      $region31: #{_times_block_body.4} parent=11 // pred_region
        _
      $region32: #{_times_block_body.4} parent=11 // pred_fallthru
        _
    $region12: #{_times_block_body.4} parent=5 // pred_fallthru
      _
    %p199 = scmp.lt.s32.totalorder %s12, 2
    // Predicated region
    $region33: #{_times_block_body.4} parent=5 // pred_check
      %p200 = pneg %p199
    $region34: #{_times_block_body.4} parent=5 // pred_check_branch
      %202 = sbr.rel (%p200) target = $region36
    $region35: #{_times_block_body.4} parent=5 // pred_region
      // Predicated region
      $region37: #{_times_block_body.4} parent=35 // pred_check
        %p203 = pneg %p32
      $region38: #{_times_block_body.4} parent=35 // pred_check_branch
        %205 = sbr.rel (%p203) target = $region40
      $region39: #{_times_block_body.4} parent=35 // pred_region
        %p206 = scmp.lt.s32.totalorder %s12, 1
        %s207 = scalar_select %p206, %s12, 1
        %s208 = smul.addr %s207, 3
        %s209 = smul.addr %s208, 4
        %s210 = scalar_lea.vmem %s0, %s209
      $region40: #{_times_block_body.4} parent=35 // pred_fallthru
        _
    $region36: #{_times_block_body.4} parent=5 // pred_fallthru
      _
    %p211 = scmp.le.s32.totalorder 1, %s12
    %p212 = scmp.lt.s32.totalorder %s12, 3
    %p213 = pnand %p211, %p212
    %p214 = pneg %p213
    // Predicated region
    $region41: #{_times_block_body.4} parent=5 // pred_check
      _
    $region42: #{_times_block_body.4} parent=5 // pred_check_branch
      %216 = sbr.rel (%p213) target = $region44
    $region43: #{_times_block_body.4} parent=5 // pred_region
      %s217 = ssub.s32 %s12, 1
      %p218 = scmp.lt.s32.totalorder %s17, 1
      %s219 = scalar_select %p218, %s17, 1
      %s220 = smul.addr %s219, 3
      %s221 = smul.addr %s220, 4
      %s222 = scalar_lea.vmem %s0, %s221
      %p223 = pneg %p38
      %p224 = pneg %p35
      %p225 = pneg %p59
      %p226 = pneg %p56
      %p227 = pneg %p80
      %p228 = pneg %p77
      %p229 = pneg %p101
      %p230 = pneg %p98
      %p231 = pneg %p122
      %p232 = pneg %p119
      %p233 = pneg %p143
      %p234 = pneg %p140
      %p235 = pneg %p169
      %p236 = pneg %p166
      %p237 = scmp.lt.s32.totalorder %s17, 1
      %s238 = scalar_select %p237, %s17, 1
      %s239 = smul.addr %s238, 8
      %s240 = scalar_lea.vmem %s6, %s239
      %p241 = scmp.lt.s32.totalorder %s17, 1
      %s242 = scalar_select %p241, %s17, 1
      %s243 = smul.addr %s242, 3
      %s244 = smul.addr %s243, 4
      %s245 = scalar_lea.vmem %s0, %s244
      %p246 = scmp.lt.s32.totalorder %s17, 1
      %s247 = scalar_select %p246, %s17, 1
      %s248 = smul.addr %s247, 8
      %s249 = scalar_lea.vmem %s6, %s248
      %v251 = vld [vmem:[%s245] sm:$0xff]
      %v252 = vld [vmem:[%s245 + $0x8] sm:$0xf]
      %v253 = vld [vmem:[%s1] sm:$0x3]
      %v255 = vunpack.c.l.b16 %v251
      %v256 = vunpack.c.h.b16 %v251
      %v257 = vpack.c.b16 %v255, %v255
      %v258 = vpack.c.b16 %v256, %v256
      %v260 = vunpack.c.l.b16 %v252
      %v261 = vpack.c.b16 %v260, %v260
      %262 = vrot.lane.b32.xlu0 %v257, 127
      %v263 = vpop.permute.xlu0 %262
      %264 = vrot.lane.b32.xlu0 %v258, 127
      %v265 = vpop.permute.xlu0 %264
      %266 = vrot.lane.b32.xlu0 %v261, 127
      %v267 = vpop.permute.xlu0 %266
      %vm268 = vcmask 1039360
      %v269 = vsel %vm268, %v263, %v265
      %v270 = vsel %vm268, %v265, %v267
      %271 = vrot.lane.b32.xlu0 %v257, 126
      %v272 = vpop.permute.xlu0 %271
      %273 = vrot.lane.b32.xlu0 %v258, 126
      %v274 = vpop.permute.xlu0 %273
      %275 = vrot.lane.b32.xlu0 %v261, 126
      %v276 = vpop.permute.xlu0 %275
      %vm277 = vcmask 1031168
      %v278 = vsel %vm277, %v272, %v274
      %v279 = vsel %vm277, %v274, %v276
      %280 = vrot.lane.b32.xlu0 %v257, 125
      %v281 = vpop.permute.xlu0 %280
      %282 = vrot.lane.b32.xlu0 %v258, 125
      %v283 = vpop.permute.xlu0 %282
      %284 = vrot.lane.b32.xlu0 %v261, 125
      %v285 = vpop.permute.xlu0 %284
      %vm286 = vcmask 1022976
      %v287 = vsel %vm286, %v281, %v283
      %v288 = vsel %vm286, %v283, %v285
      %289 = vrot.lane.b32.xlu0 %v257, 124
      %v290 = vpop.permute.xlu0 %289
      %291 = vrot.lane.b32.xlu0 %v258, 124
      %v292 = vpop.permute.xlu0 %291
      %293 = vrot.lane.b32.xlu0 %v261, 124
      %v294 = vpop.permute.xlu0 %293
      %vm295 = vcmask 1014784
      %v296 = vsel %vm295, %v290, %v292
      %v297 = vsel %vm295, %v292, %v294
      %298 = vrot.lane.b32.xlu0 %v257, 116
      %v299 = vpop.permute.xlu0 %298
      %300 = vrot.lane.b32.xlu0 %v258, 116
      %v301 = vpop.permute.xlu0 %300
      %302 = vrot.lane.b32.xlu0 %v261, 116
      %v303 = vpop.permute.xlu0 %302
      %vm304 = vcmask 949248
      %v305 = vsel %vm304, %v299, %v301
      %v306 = vsel %vm304, %v301, %v303
      %307 = vrot.lane.b32.xlu0 %v257, 115
      %v308 = vpop.permute.xlu0 %307
      %309 = vrot.lane.b32.xlu0 %v258, 115
      %v310 = vpop.permute.xlu0 %309
      %311 = vrot.lane.b32.xlu0 %v261, 115
      %v312 = vpop.permute.xlu0 %311
      %vm313 = vcmask 941056
      %v314 = vsel %vm313, %v308, %v310
      %v315 = vsel %vm313, %v310, %v312
      %316 = vrot.lane.b32.xlu0 %v257, 114
      %v317 = vpop.permute.xlu0 %316
      %318 = vrot.lane.b32.xlu0 %v258, 114
      %v319 = vpop.permute.xlu0 %318
      %320 = vrot.lane.b32.xlu0 %v261, 114
      %v321 = vpop.permute.xlu0 %320
      %vm322 = vcmask 932864
      %v323 = vsel %vm322, %v317, %v319
      %v324 = vsel %vm322, %v319, %v321
      %325 = vrot.lane.b32.xlu0 %v257, 113
      %v326 = vpop.permute.xlu0 %325
      %327 = vrot.lane.b32.xlu0 %v258, 113
      %v328 = vpop.permute.xlu0 %327
      %329 = vrot.lane.b32.xlu0 %v261, 113
      %v330 = vpop.permute.xlu0 %329
      %vm331 = vcmask 924672
      %v332 = vsel %vm331, %v326, %v328
      %v333 = vsel %vm331, %v328, %v330
      %334 = vrot.lane.b32.xlu0 %v257, 112
      %v335 = vpop.permute.xlu0 %334
      %336 = vrot.lane.b32.xlu0 %v258, 112
      %v337 = vpop.permute.xlu0 %336
      %338 = vrot.lane.b32.xlu0 %v261, 112
      %v339 = vpop.permute.xlu0 %338
      %vm340 = vcmask 916480
      %v341 = vsel %vm340, %v335, %v337
      %v342 = vsel %vm340, %v337, %v339
      %343 = vrot.lane.b32.xlu0 %v257, 104
      %v344 = vpop.permute.xlu0 %343
      %345 = vrot.lane.b32.xlu0 %v258, 104
      %v346 = vpop.permute.xlu0 %345
      %347 = vrot.lane.b32.xlu0 %v261, 104
      %v348 = vpop.permute.xlu0 %347
      %vm349 = vcmask 850944
      %v350 = vsel %vm349, %v344, %v346
      %v351 = vsel %vm349, %v346, %v348
      %352 = vrot.lane.b32.xlu0 %v257, 103
      %v353 = vpop.permute.xlu0 %352
      %354 = vrot.lane.b32.xlu0 %v258, 103
      %v355 = vpop.permute.xlu0 %354
      %356 = vrot.lane.b32.xlu0 %v261, 103
      %v357 = vpop.permute.xlu0 %356
      %vm358 = vcmask 842752
      %v359 = vsel %vm358, %v353, %v355
      %v360 = vsel %vm358, %v355, %v357
      %361 = vrot.lane.b32.xlu0 %v257, 102
      %v362 = vpop.permute.xlu0 %361
      %363 = vrot.lane.b32.xlu0 %v258, 102
      %v364 = vpop.permute.xlu0 %363
      %365 = vrot.lane.b32.xlu0 %v261, 102
      %v366 = vpop.permute.xlu0 %365
      %vm367 = vcmask 834560
      %v368 = vsel %vm367, %v362, %v364
      %v369 = vsel %vm367, %v364, %v366
      %370 = vrot.lane.b32.xlu0 %v257, 101
      %v371 = vpop.permute.xlu0 %370
      %372 = vrot.lane.b32.xlu0 %v258, 101
      %v373 = vpop.permute.xlu0 %372
      %374 = vrot.lane.b32.xlu0 %v261, 101
      %v375 = vpop.permute.xlu0 %374
      %vm376 = vcmask 826368
      %v377 = vsel %vm376, %v371, %v373
      %v378 = vsel %vm376, %v373, %v375
      %379 = vrot.lane.b32.xlu0 %v257, 100
      %v380 = vpop.permute.xlu0 %379
      %381 = vrot.lane.b32.xlu0 %v258, 100
      %v382 = vpop.permute.xlu0 %381
      %383 = vrot.lane.b32.xlu0 %v261, 100
      %v384 = vpop.permute.xlu0 %383
      %vm385 = vcmask 818176
      %v386 = vsel %vm385, %v380, %v382
      %v387 = vsel %vm385, %v382, %v384
      %388 = vrot.lane.b32.xlu0 %v257, 92
      %v389 = vpop.permute.xlu0 %388
      %390 = vrot.lane.b32.xlu0 %v258, 92
      %v391 = vpop.permute.xlu0 %390
      %392 = vrot.lane.b32.xlu0 %v261, 92
      %v393 = vpop.permute.xlu0 %392
      %vm394 = vcmask 752640
      %v395 = vsel %vm394, %v389, %v391
      %v396 = vsel %vm394, %v391, %v393
      %vm397 = vcmask 1043456
      %v400 = vsel %vm397, %v257, %v269
      %v404 = vsel %vm397, %v258, %v270
      %v408 = vsel %vm397, %v278, %v287
      %v412 = vsel %vm397, %v279, %v288
      %v416 = vsel %vm397, %v296, %v305
      %v420 = vsel %vm397, %v297, %v306
      %v424 = vsel %vm397, %v314, %v323
      %v428 = vsel %vm397, %v315, %v324
      %v432 = vsel %vm397, %v332, %v341
      %v436 = vsel %vm397, %v333, %v342
      %v440 = vsel %vm397, %v350, %v359
      %v444 = vsel %vm397, %v351, %v360
      %v448 = vsel %vm397, %v368, %v377
      %v452 = vsel %vm397, %v369, %v378
      %v456 = vsel %vm397, %v386, %v395
      %v460 = vsel %vm397, %v387, %v396
      %462 = vrot.lane.b32.xlu0 %v257, 117
      %v463 = vpop.permute.xlu0 %462
      %464 = vrot.lane.b32.xlu0 %v258, 117
      %v465 = vpop.permute.xlu0 %464
      %466 = vrot.lane.b32.xlu0 %v261, 117
      %v467 = vpop.permute.xlu0 %466
      %vm468 = vcmask 957440
      %v469 = vsel %vm468, %v463, %v465
      %v470 = vsel %vm468, %v465, %v467
      %v473 = vsel %vm397, %v261, %v267
      %v476 = vsel %vm397, %v276, %v285
      %v478 = vsel %vm397, %v469, %v305
      %v480 = vsel %vm397, %v470, %v306
      %v483 = vsel %vm397, %v467, %v303
      %v486 = vsel %vm397, %v312, %v321
      %499 = vrot.lane.b32.xlu0 %v400, 91
      %v500 = vpop.permute.xlu0 %499
      %501 = vrot.lane.b32.xlu0 %v404, 91
      %v502 = vpop.permute.xlu0 %501
      %503 = vrot.lane.b32.xlu0 %v473, 91
      %v504 = vpop.permute.xlu0 %503
      %505 = vrot.lane.b32.xlu0 %v408, 91
      %v506 = vpop.permute.xlu0 %505
      %507 = vrot.lane.b32.xlu0 %v412, 91
      %v508 = vpop.permute.xlu0 %507
      %509 = vrot.lane.b32.xlu0 %v476, 91
      %v510 = vpop.permute.xlu0 %509
      %511 = vrot.lane.b32.xlu0 %v478, 91
      %v512 = vpop.permute.xlu0 %511
      %513 = vrot.lane.b32.xlu0 %v480, 91
      %v514 = vpop.permute.xlu0 %513
      %515 = vrot.lane.b32.xlu0 %v483, 91
      %v516 = vpop.permute.xlu0 %515
      %517 = vrot.lane.b32.xlu0 %v424, 91
      %v518 = vpop.permute.xlu0 %517
      %519 = vrot.lane.b32.xlu0 %v428, 91
      %v520 = vpop.permute.xlu0 %519
      %521 = vrot.lane.b32.xlu0 %v486, 91
      %v522 = vpop.permute.xlu0 %521
      %523 = vrot.lane.b32.xlu0 %v332, 91
      %v524 = vpop.permute.xlu0 %523
      %525 = vrot.lane.b32.xlu0 %v333, 91
      %v526 = vpop.permute.xlu0 %525
      %527 = vrot.lane.b32.xlu0 %v330, 91
      %v528 = vpop.permute.xlu0 %527
      %vm529 = vcmask 744448
      %v530 = vsel %vm529, %v500, %v502
      %v531 = vsel %vm529, %v502, %v504
      %v532 = vsel %vm529, %v506, %v508
      %v533 = vsel %vm529, %v508, %v510
      %v534 = vsel %vm529, %v512, %v514
      %v535 = vsel %vm529, %v514, %v516
      %v536 = vsel %vm529, %v518, %v520
      %v537 = vsel %vm529, %v520, %v522
      %v538 = vsel %vm529, %v524, %v526
      %v539 = vsel %vm529, %v526, %v528
      %v548 = vld [vmem:[%s2] sm:$0xff]
      %v549 = vld [vmem:[%s2 + $0x8] sm:$0xff]
      %v550 = vld [vmem:[%s3] sm:$0xff]
      %v551 = vld [vmem:[%s3 + $0x8] sm:$0xff]
      %553 = vset.pattern.permute.xlu0 0
      %554 = vperm.xlu0 %553, %v550
      %v555 = vpop.permute.xlu0 %554
      %558 = vset.pattern.permute.xlu0 0
      %559 = vperm.xlu0 %558, %v551
      %v560 = vpop.permute.xlu0 %559
      %v564 = vunpack.c.l.b16 %v548
      %v565 = vunpack.c.h.b16 %v548
      %v566 = vunpack.c.l.b16 %v549
      %v567 = vunpack.c.h.b16 %v549
      %v568 = vpack.c.b16 %v566, %v564
      %v569 = vpack.c.b16 %v567, %v565
      %vm571 = vcmask 588800
      %v573 = vsel %vm571, %v569, 0
      %v576 = vsel %vm397, %v538, 0
      %v579 = vsel %vm397, %v539, 0
      %581 = vmatprep.subr.bf16.mxu0 %v460
      %582 = vmatpush1.bf16.msra.mxu0 %v456
      %583 = vmatprep.subr.bf16.mxu0 %v452
      %584 = vmatpush1.bf16.msra.mxu0 %v448
      %585 = vmatprep.subr.bf16.mxu0 %v444
      %586 = vmatpush1.bf16.msra.mxu0 %v440
      %587 = vmatprep.subr.bf16.mxu0 %v436
      %588 = vmatpush1.bf16.msra.mxu0 %v432
      %589 = vmatprep.subr.bf16.mxu0 %v428
      %590 = vmatpush1.bf16.msra.mxu0 %v424
      %591 = vmatprep.subr.bf16.mxu0 %v420
      %592 = vmatpush1.bf16.msra.mxu0 %v416
      %593 = vmatprep.subr.bf16.mxu0 %v412
      %594 = vmatpush1.bf16.msra.mxu0 %v408
      %595 = vmatprep.subr.bf16.mxu0 %v404
      %596 = vmatpush1.bf16.msra.mxu0 %v400
      %597 = vmatprep.subr.bf16.mxu0 0
      %598 = vmatpush2.bf16.msra.mxu0 0
      %599 = vmatprep.subr.bf16.mxu0 0
      %600 = vmatpush2.bf16.msra.mxu0 0
      %601 = vmatprep.subr.bf16.mxu0 0
      %602 = vmatpush2.bf16.msra.mxu0 0
      %603 = vmatprep.subr.bf16.mxu0 %v579
      %604 = vmatpush2.bf16.msra.mxu0 %v576
      %605 = vmatprep.subr.bf16.mxu0 %v537
      %606 = vmatpush2.bf16.msra.mxu0 %v536
      %607 = vmatprep.subr.bf16.mxu0 %v535
      %608 = vmatpush2.bf16.msra.mxu0 %v534
      %609 = vmatprep.subr.bf16.mxu0 %v533
      %610 = vmatpush2.bf16.msra.mxu0 %v532
      %611 = vmatprep.subr.bf16.mxu0 %v531
      %612 = vmatpush2.bf16.msra.mxu0 %v530
      %613 = vmatprep.mubr.bf16.mxu0 %v573
      %614 = vmatmul.mubr.bf16.gmra.mxu0 %v568
      %v615 = vpop.f32.mrf.mxu0
      %v616 = vadd.f32 %v555, %v615
      %v617 = vpop.f32.mrf.mxu0
      %v618 = vadd.f32 %v555, %v617
      %v619 = vpop.f32.mrf.mxu0
      %v620 = vadd.f32 %v560, %v619
      %v621 = vpop.f32.mrf.mxu0
      %v622 = vadd.f32 %v560, %v621
      %623 = vdwg.mxu0
      %v624 = vmul.f32 %v616, 0.5
      %v625 = vmul.f32 %v618, 0.5
      %v626 = vmul.f32 %v620, 0.5
      %v627 = vmul.f32 %v622, 0.5
      %v628 = vmul.f32 %v616, 0.70710677
      %v629 = vmul.f32 %v618, 0.70710677
      %v630 = vmul.f32 %v620, 0.70710677
      %v631 = vmul.f32 %v622, 0.70710677
      %v632 = verf.f32.pop %v628
      %v633 = verf.f32.pop %v629
      %v634 = verf.f32.pop %v630
      %v635 = verf.f32.pop %v631
      %v636 = vadd.f32 %v632, 1.0
      %v637 = vadd.f32 %v633, 1.0
      %v638 = vadd.f32 %v634, 1.0
      %v639 = vadd.f32 %v635, 1.0
      %v640 = vmul.f32 %v624, %v636
      %v641 = vmul.f32 %v625, %v637
      %v642 = vmul.f32 %v626, %v638
      %v643 = vmul.f32 %v627, %v639
      %v645 = vlaneseq
      %v646 = vshrl.u32 %v645, 7
      %v647 = vsub.s32 0, %v646
      %v648 = vrot.slane %v253, %v647
      %v649 = vlaneseq
      %v650 = vshrl.u32 %v649, 7
      %v651 = vsub.s32 1, %v650
      %v652 = vrot.slane %v253, %v651
      %v655 = vmul.f32 %v640, %v648
      %v656 = vmul.f32 %v641, %v652
      %v657 = vmul.f32 %v642, %v648
      %v658 = vmul.f32 %v643, %v652
      %v659 = vpack.c.bf16 %v657, %v655
      %v660 = vpack.c.bf16 %v658, %v656
      %663 = vrot.lane.b32.xlu0 %v659, 127
      %v664 = vpop.permute.xlu0 %663
      %665 = vrot.lane.b32.xlu0 %v660, 127
      %v666 = vpop.permute.xlu0 %665
      %v667 = vsel %vm268, %v664, %v666
      %669 = vrot.lane.b32.xlu0 %v659, 126
      %v670 = vpop.permute.xlu0 %669
      %671 = vrot.lane.b32.xlu0 %v660, 126
      %v672 = vpop.permute.xlu0 %671
      %v673 = vsel %vm277, %v670, %v672
      %675 = vrot.lane.b32.xlu0 %v659, 125
      %v676 = vpop.permute.xlu0 %675
      %677 = vrot.lane.b32.xlu0 %v660, 125
      %v678 = vpop.permute.xlu0 %677
      %v679 = vsel %vm286, %v676, %v678
      %681 = vrot.lane.b32.xlu0 %v659, 124
      %v682 = vpop.permute.xlu0 %681
      %683 = vrot.lane.b32.xlu0 %v660, 124
      %v684 = vpop.permute.xlu0 %683
      %v685 = vsel %vm295, %v682, %v684
      %687 = vrot.lane.b32.xlu0 %v659, 116
      %v688 = vpop.permute.xlu0 %687
      %689 = vrot.lane.b32.xlu0 %v660, 116
      %v690 = vpop.permute.xlu0 %689
      %v691 = vsel %vm304, %v688, %v690
      %693 = vrot.lane.b32.xlu0 %v659, 115
      %v694 = vpop.permute.xlu0 %693
      %695 = vrot.lane.b32.xlu0 %v660, 115
      %v696 = vpop.permute.xlu0 %695
      %v697 = vsel %vm313, %v694, %v696
      %699 = vrot.lane.b32.xlu0 %v659, 114
      %v700 = vpop.permute.xlu0 %699
      %701 = vrot.lane.b32.xlu0 %v660, 114
      %v702 = vpop.permute.xlu0 %701
      %v703 = vsel %vm322, %v700, %v702
      %705 = vrot.lane.b32.xlu0 %v659, 113
      %v706 = vpop.permute.xlu0 %705
      %707 = vrot.lane.b32.xlu0 %v660, 113
      %v708 = vpop.permute.xlu0 %707
      %v709 = vsel %vm331, %v706, %v708
      %711 = vrot.lane.b32.xlu0 %v659, 112
      %v712 = vpop.permute.xlu0 %711
      %713 = vrot.lane.b32.xlu0 %v660, 112
      %v714 = vpop.permute.xlu0 %713
      %v715 = vsel %vm340, %v712, %v714
      %717 = vrot.lane.b32.xlu0 %v659, 104
      %v718 = vpop.permute.xlu0 %717
      %719 = vrot.lane.b32.xlu0 %v660, 104
      %v720 = vpop.permute.xlu0 %719
      %v721 = vsel %vm349, %v718, %v720
      %723 = vrot.lane.b32.xlu0 %v659, 103
      %v724 = vpop.permute.xlu0 %723
      %725 = vrot.lane.b32.xlu0 %v660, 103
      %v726 = vpop.permute.xlu0 %725
      %v727 = vsel %vm358, %v724, %v726
      %729 = vrot.lane.b32.xlu0 %v659, 102
      %v730 = vpop.permute.xlu0 %729
      %731 = vrot.lane.b32.xlu0 %v660, 102
      %v732 = vpop.permute.xlu0 %731
      %v733 = vsel %vm367, %v730, %v732
      %735 = vrot.lane.b32.xlu0 %v659, 101
      %v736 = vpop.permute.xlu0 %735
      %737 = vrot.lane.b32.xlu0 %v660, 101
      %v738 = vpop.permute.xlu0 %737
      %v739 = vsel %vm376, %v736, %v738
      %741 = vrot.lane.b32.xlu0 %v659, 100
      %v742 = vpop.permute.xlu0 %741
      %743 = vrot.lane.b32.xlu0 %v660, 100
      %v744 = vpop.permute.xlu0 %743
      %v745 = vsel %vm385, %v742, %v744
      %747 = vrot.lane.b32.xlu0 %v659, 92
      %v748 = vpop.permute.xlu0 %747
      %749 = vrot.lane.b32.xlu0 %v660, 92
      %v750 = vpop.permute.xlu0 %749
      %v751 = vsel %vm394, %v748, %v750
      %753 = vrot.lane.b32.xlu0 %v659, 117
      %v754 = vpop.permute.xlu0 %753
      %755 = vrot.lane.b32.xlu0 %v660, 117
      %v756 = vpop.permute.xlu0 %755
      %v757 = vsel %vm468, %v754, %v756
      %758 = vrot.lane.b32.xlu0 %v659, 91
      %v759 = vpop.permute.xlu0 %758
      %760 = vrot.lane.b32.xlu0 %v660, 91
      %v761 = vpop.permute.xlu0 %760
      %762 = vrot.lane.b32.xlu0 %v667, 91
      %v763 = vpop.permute.xlu0 %762
      %764 = vrot.lane.b32.xlu0 %v666, 91
      %v765 = vpop.permute.xlu0 %764
      %766 = vrot.lane.b32.xlu0 %v673, 91
      %v767 = vpop.permute.xlu0 %766
      %768 = vrot.lane.b32.xlu0 %v672, 91
      %v769 = vpop.permute.xlu0 %768
      %770 = vrot.lane.b32.xlu0 %v679, 91
      %v771 = vpop.permute.xlu0 %770
      %772 = vrot.lane.b32.xlu0 %v678, 91
      %v773 = vpop.permute.xlu0 %772
      %774 = vrot.lane.b32.xlu0 %v757, 91
      %v775 = vpop.permute.xlu0 %774
      %776 = vrot.lane.b32.xlu0 %v756, 91
      %v777 = vpop.permute.xlu0 %776
      %778 = vrot.lane.b32.xlu0 %v691, 91
      %v779 = vpop.permute.xlu0 %778
      %780 = vrot.lane.b32.xlu0 %v690, 91
      %v781 = vpop.permute.xlu0 %780
      %782 = vrot.lane.b32.xlu0 %v697, 91
      %v783 = vpop.permute.xlu0 %782
      %784 = vrot.lane.b32.xlu0 %v696, 91
      %v785 = vpop.permute.xlu0 %784
      %786 = vrot.lane.b32.xlu0 %v703, 91
      %v787 = vpop.permute.xlu0 %786
      %788 = vrot.lane.b32.xlu0 %v702, 91
      %v789 = vpop.permute.xlu0 %788
      %790 = vrot.lane.b32.xlu0 %v709, 91
      %v791 = vpop.permute.xlu0 %790
      %792 = vrot.lane.b32.xlu0 %v708, 91
      %v793 = vpop.permute.xlu0 %792
      %v794 = vsel %vm529, %v759, %v761
      %v795 = vsel %vm529, %v763, %v765
      %v796 = vsel %vm529, %v767, %v769
      %v797 = vsel %vm529, %v771, %v773
      %v798 = vsel %vm529, %v775, %v777
      %v799 = vsel %vm529, %v779, %v781
      %v800 = vsel %vm529, %v783, %v785
      %v801 = vsel %vm529, %v787, %v789
      %v802 = vsel %vm529, %v791, %v793
      %v812 = vld [vmem:[%s4] sm:$0xff]
      %v813 = vld [vmem:[%s4 + $0x8] sm:$0xff]
      %v814 = vld [vmem:[%s5] sm:$0xff]
      %816 = vset.pattern.permute.xlu0 0
      %817 = vperm.xlu0 %816, %v814
      %v818 = vpop.permute.xlu0 %817
      %v822 = vunpack.c.l.b16 %v812
      %v823 = vunpack.c.h.b16 %v812
      %v824 = vunpack.c.l.b16 %v813
      %v825 = vunpack.c.h.b16 %v813
      %v826 = vpack.c.b16 %v822, %v822
      %v827 = vpack.c.b16 %v823, %v823
      %v828 = vpack.c.b16 %v824, %v824
      %v829 = vpack.c.b16 %v825, %v825
      %vm833 = vcmask 130048
      %v835 = vsel %vm833, %v829, 0
      %837 = vmatprep.subr.bf16.mxu0 0
      %838 = vmatpush1.bf16.msra.mxu0 %v703
      %839 = vmatprep.subr.bf16.mxu0 0
      %840 = vmatpush1.bf16.msra.mxu0 %v697
      %841 = vmatprep.subr.bf16.mxu0 0
      %842 = vmatpush1.bf16.msra.mxu0 %v691
      %843 = vmatprep.subr.bf16.mxu0 0
      %844 = vmatpush1.bf16.msra.mxu0 %v685
      %845 = vmatprep.subr.bf16.mxu0 0
      %846 = vmatpush1.bf16.msra.mxu0 %v679
      %847 = vmatprep.subr.bf16.mxu0 0
      %848 = vmatpush1.bf16.msra.mxu0 %v673
      %849 = vmatprep.subr.bf16.mxu0 0
      %850 = vmatpush1.bf16.msra.mxu0 %v667
      %851 = vmatprep.subr.bf16.mxu0 0
      %852 = vmatpush1.bf16.msra.mxu0 %v659
      %853 = vmatprep.subr.bf16.mxu0 0
      %854 = vmatpush2.bf16.msra.mxu0 %v751
      %855 = vmatprep.subr.bf16.mxu0 0
      %856 = vmatpush2.bf16.msra.mxu0 %v745
      %857 = vmatprep.subr.bf16.mxu0 0
      %858 = vmatpush2.bf16.msra.mxu0 %v739
      %859 = vmatprep.subr.bf16.mxu0 0
      %860 = vmatpush2.bf16.msra.mxu0 %v733
      %861 = vmatprep.subr.bf16.mxu0 0
      %862 = vmatpush2.bf16.msra.mxu0 %v727
      %863 = vmatprep.subr.bf16.mxu0 0
      %864 = vmatpush2.bf16.msra.mxu0 %v721
      %865 = vmatprep.subr.bf16.mxu0 0
      %866 = vmatpush2.bf16.msra.mxu0 %v715
      %867 = vmatprep.subr.bf16.mxu0 0
      %868 = vmatpush2.bf16.msra.mxu0 %v709
      %869 = vmatprep.mubr.bf16.mxu0 %v827
      %870 = vmatmul.mubr.bf16.gmra.mxu0 %v826
      %v871 = vpop.f32.mrf.mxu0
      %v872 = vadd.f32 %v818, %v871
      %v873 = vpop.f32.mrf.mxu0
      %v874 = vpop.f32.mrf.mxu0
      %v875 = vpop.f32.mrf.mxu0
      %876 = vdwg.mxu0
      %877 = vmatprep.subr.bf16.mxu0 0
      %878 = vmatpush1.bf16.msra.mxu0 %v801
      %879 = vmatprep.subr.bf16.mxu0 0
      %880 = vmatpush1.bf16.msra.mxu0 %v800
      %881 = vmatprep.subr.bf16.mxu0 0
      %882 = vmatpush1.bf16.msra.mxu0 %v799
      %883 = vmatprep.subr.bf16.mxu0 0
      %884 = vmatpush1.bf16.msra.mxu0 %v798
      %885 = vmatprep.subr.bf16.mxu0 0
      %886 = vmatpush1.bf16.msra.mxu0 %v797
      %887 = vmatprep.subr.bf16.mxu0 0
      %888 = vmatpush1.bf16.msra.mxu0 %v796
      %889 = vmatprep.subr.bf16.mxu0 0
      %890 = vmatpush1.bf16.msra.mxu0 %v795
      %891 = vmatprep.subr.bf16.mxu0 0
      %892 = vmatpush1.bf16.msra.mxu0 %v794
      %893 = vmatprep.subr.bf16.mxu0 0
      %894 = vmatpush2.bf16.msra.mxu0 0
      %895 = vmatprep.subr.bf16.mxu0 0
      %896 = vmatpush2.bf16.msra.mxu0 0
      %897 = vmatprep.subr.bf16.mxu0 0
      %898 = vmatpush2.bf16.msra.mxu0 0
      %899 = vmatprep.subr.bf16.mxu0 0
      %900 = vmatpush2.bf16.msra.mxu0 0
      %901 = vmatprep.subr.bf16.mxu0 0
      %902 = vmatpush2.bf16.msra.mxu0 0
      %903 = vmatprep.subr.bf16.mxu0 0
      %904 = vmatpush2.bf16.msra.mxu0 0
      %905 = vmatprep.subr.bf16.mxu0 0
      %906 = vmatpush2.bf16.msra.mxu0 0
      %907 = vmatprep.subr.bf16.mxu0 0
      %908 = vmatpush2.bf16.msra.mxu0 %v802
      %909 = vmatprep.mubr.bf16.mxu0 %v835
      %910 = vmatmul.mubr.bf16.gmra.mxu0 %v828
      %v911 = vpop.f32.mrf.mxu0
      %v912 = vadd.f32 %v872, %v911
      %v913 = vpop.f32.mrf.mxu0
      %v914 = vpop.f32.mrf.mxu0
      %v915 = vpop.f32.mrf.mxu0
      %916 = vdwg.mxu0
      %917 = vst [vmem:[%s249] sm:$0xff] %v912
      %p918 = scmp.lt.s32.totalorder %s17, 1
      %s919 = scalar_select %p918, %s17, 1
      %s920 = smul.addr %s919, 8
      %s921 = scalar_lea.vmem %s6, %s920
      // Predicated region
      $region45: #{_times_block_body.4} parent=43 // pred_check
        %p922 = pneg %p166
      $region46: #{_times_block_body.4} parent=43 // pred_check_branch
        %924 = sbr.rel (%p922) target = $region48
      $region47: #{_times_block_body.4} parent=43 // pred_region
        _
      $region48: #{_times_block_body.4} parent=43 // pred_fallthru
        _
    $region44: #{_times_block_body.4} parent=5 // pred_fallthru
      _
    %p925 = scmp.le.s32.totalorder 2, %s12
    // Predicated region
    $region49: #{_times_block_body.4} parent=5 // pred_check
      %p926 = pneg %p925
    $region50: #{_times_block_body.4} parent=5 // pred_check_branch
      %928 = sbr.rel (%p926) target = $region52
    $region51: #{_times_block_body.4} parent=5 // pred_region
      %s929 = ssub.s32 %s12, 2
      // Predicated region
      $region53: #{_times_block_body.4} parent=51 // pred_check
        %p930 = pneg %p172
      $region54: #{_times_block_body.4} parent=51 // pred_check_branch
        %932 = sbr.rel (%p930) target = $region56
      $region55: #{_times_block_body.4} parent=51 // pred_region
        %p933 = scmp.lt.s32.totalorder %s18, 1
        %s934 = scalar_select %p933, %s18, 1
        %s935 = smul.addr %s934, 8
        %s936 = scalar_lea.vmem %s6, %s935
      $region56: #{_times_block_body.4} parent=51 // pred_fallthru
        _
    $region52: #{_times_block_body.4} parent=5 // pred_fallthru
      _
  $region6: #{_times_block_body.4} parent=0 // loop_footer
    %s16 = sadd.s32 1, %s12
  $region7: #{_times_block_body.4} parent=0 // loop_footer_branch
    %11 = sbr.rel target = $region3
  $region8: #{_times_block_body.4} parent=0 // loop_exit
    _

// kernel: _times_block_body.3
$region0: #{_times_block_body.3}
  #allocation0 [shape = 'u32[]', space=smem, size = 0x4, offset = 0x4, fixed_abs, tag = 'smem constant byte address 0x4 - core index']
  #allocation1 [shape = 'u32[144,128]{1,0:T(1,128)}', space=vmem, size = 0x12000, scoped, tag = 'internal scratch']
  %s0 = inlined_call_operand.vmem [shape: bf16[2,8,292], index: 0, kind: input, shape index: {}]
  %s1 = inlined_call_operand.vmem [shape: f32[1,256], index: 1, kind: input, shape index: {}]
  %s2 = inlined_call_operand.vmem [shape: bf16[16,200], index: 2, kind: input, shape index: {}]
  %s3 = inlined_call_operand.vmem [shape: f32[16,1], index: 3, kind: input, shape index: {}]
  %s4 = inlined_call_operand.vmem [shape: bf16[8,400], index: 4, kind: input, shape index: {}]
  %s5 = inlined_call_operand.vmem [shape: f32[8,1], index: 5, kind: input, shape index: {}]
  %s6 = inlined_call_operand.vmem [shape: f32[2,8,128], index: 6, kind: output, shape index: {}]
  %s7 = sld [smem:[#allocation0]]
  $region57: #{_times_block_body.3} parent=0
    _
  %s9 = ssub.s32 1, %s7
  %s10 = scalar_select 0, %s9, %s7
  loop: start=0, step=1, limit=4
  $region2: #{_times_block_body.3} parent=0 // loop_pre_header
    _
  $region3: #{_times_block_body.3} parent=0 // loop_header
    %s12 = sphi 0, %s16
    %p13 = scmp.ge.s32.totalorder %s12, 4
    %s22 = sphi 0, %s24
    %s25 = sphi 0, %s22
    %s26 = sphi 0, %s25
    %s42 = sphi 0, %s26
    %s46 = sphi 0, %s46
    %s48 = sphi 0, %s46
    %s49 = sphi 0, %s48
    %s63 = sphi 0, %s49
    %s67 = sphi 0, %s67
    %s69 = sphi 0, %s67
    %s70 = sphi 0, %s69
    %s84 = sphi 0, %s70
    %s88 = sphi 0, %s88
    %s90 = sphi 0, %s88
    %s91 = sphi 0, %s90
    %s105 = sphi 0, %s91
    %s109 = sphi 0, %s109
    %s111 = sphi 0, %s109
    %s112 = sphi 0, %s111
    %s126 = sphi 0, %s112
    %s130 = sphi 0, %s130
    %s132 = sphi 0, %s130
    %s133 = sphi 0, %s132
    %s147 = sphi 0, %s133
    %s153 = sphi 0, %s155
    %s156 = sphi 0, %s153
    %s157 = sphi 0, %s156
    %s173 = sphi 0, %s157
  $region4: #{_times_block_body.3} parent=0 // loop_header_branch
    %15 = sbr.rel (%p13) target = $region8
  $region5: #{_times_block_body.3} parent=0 // loop_body
    %s17 = ssub.s32 %s12, 1
    %s18 = ssub.s32 %s12, 2
    %s19 = sadd.s32 %s12, 1
    %s20 = ssub.s32 %s12, %s19
    %p21 = scmp.eq.s32.totalorder %s20, 0
    %s23 = sadd.s32 %s22, 1
    %s24 = scalar_select %p21, %s22, %s23
    %p27 = pneg %p21
    %p28 = scmp.eq.s32.totalorder %s12, 1
    %p29 = por %p27, %p28
    %p30 = scmp.ne.s32.totalorder %s22, %s25
    %p31 = scmp.eq.s32.totalorder %s12, 0
    %p32 = por %p30, %p31
    %p33 = scmp.ne.s32.totalorder %s22, %s25
    %p34 = scmp.eq.s32.totalorder %s17, 1
    %p35 = por %p33, %p34
    %p36 = scmp.ne.s32.totalorder %s25, %s26
    %p37 = scmp.eq.s32.totalorder %s17, 0
    %p38 = por %p36, %p37
    %p39 = scmp.ne.s32.totalorder %s25, %s26
    %p40 = scmp.eq.s32.totalorder %s18, 1
    %p41 = por %p39, %p40
    %p43 = scmp.ne.s32.totalorder %s26, %s42
    %p44 = scmp.eq.s32.totalorder %s18, 0
    %p45 = por %p43, %p44
    %s47 = sadd.s32 %s46, 1
    %p50 = scmp.eq.s32.totalorder %s12, 1
    %p51 = scmp.ne.s32.totalorder %s46, %s48
    %p52 = scmp.eq.s32.totalorder %s12, 0
    %p53 = por %p51, %p52
    %p54 = scmp.ne.s32.totalorder %s46, %s48
    %p55 = scmp.eq.s32.totalorder %s17, 1
    %p56 = por %p54, %p55
    %p57 = scmp.ne.s32.totalorder %s48, %s49
    %p58 = scmp.eq.s32.totalorder %s17, 0
    %p59 = por %p57, %p58
    %p60 = scmp.ne.s32.totalorder %s48, %s49
    %p61 = scmp.eq.s32.totalorder %s18, 1
    %p62 = por %p60, %p61
    %p64 = scmp.ne.s32.totalorder %s49, %s63
    %p65 = scmp.eq.s32.totalorder %s18, 0
    %p66 = por %p64, %p65
    %s68 = sadd.s32 %s67, 1
    %p71 = scmp.eq.s32.totalorder %s12, 1
    %p72 = scmp.ne.s32.totalorder %s67, %s69
    %p73 = scmp.eq.s32.totalorder %s12, 0
    %p74 = por %p72, %p73
    %p75 = scmp.ne.s32.totalorder %s67, %s69
    %p76 = scmp.eq.s32.totalorder %s17, 1
    %p77 = por %p75, %p76
    %p78 = scmp.ne.s32.totalorder %s69, %s70
    %p79 = scmp.eq.s32.totalorder %s17, 0
    %p80 = por %p78, %p79
    %p81 = scmp.ne.s32.totalorder %s69, %s70
    %p82 = scmp.eq.s32.totalorder %s18, 1
    %p83 = por %p81, %p82
    %p85 = scmp.ne.s32.totalorder %s70, %s84
    %p86 = scmp.eq.s32.totalorder %s18, 0
    %p87 = por %p85, %p86
    %s89 = sadd.s32 %s88, 1
    %p92 = scmp.eq.s32.totalorder %s12, 1
    %p93 = scmp.ne.s32.totalorder %s88, %s90
    %p94 = scmp.eq.s32.totalorder %s12, 0
    %p95 = por %p93, %p94
    %p96 = scmp.ne.s32.totalorder %s88, %s90
    %p97 = scmp.eq.s32.totalorder %s17, 1
    %p98 = por %p96, %p97
    %p99 = scmp.ne.s32.totalorder %s90, %s91
    %p100 = scmp.eq.s32.totalorder %s17, 0
    %p101 = por %p99, %p100
    %p102 = scmp.ne.s32.totalorder %s90, %s91
    %p103 = scmp.eq.s32.totalorder %s18, 1
    %p104 = por %p102, %p103
    %p106 = scmp.ne.s32.totalorder %s91, %s105
    %p107 = scmp.eq.s32.totalorder %s18, 0
    %p108 = por %p106, %p107
    %s110 = sadd.s32 %s109, 1
    %p113 = scmp.eq.s32.totalorder %s12, 1
    %p114 = scmp.ne.s32.totalorder %s109, %s111
    %p115 = scmp.eq.s32.totalorder %s12, 0
    %p116 = por %p114, %p115
    %p117 = scmp.ne.s32.totalorder %s109, %s111
    %p118 = scmp.eq.s32.totalorder %s17, 1
    %p119 = por %p117, %p118
    %p120 = scmp.ne.s32.totalorder %s111, %s112
    %p121 = scmp.eq.s32.totalorder %s17, 0
    %p122 = por %p120, %p121
    %p123 = scmp.ne.s32.totalorder %s111, %s112
    %p124 = scmp.eq.s32.totalorder %s18, 1
    %p125 = por %p123, %p124
    %p127 = scmp.ne.s32.totalorder %s112, %s126
    %p128 = scmp.eq.s32.totalorder %s18, 0
    %p129 = por %p127, %p128
    %s131 = sadd.s32 %s130, 1
    %p134 = scmp.eq.s32.totalorder %s12, 1
    %p135 = scmp.ne.s32.totalorder %s130, %s132
    %p136 = scmp.eq.s32.totalorder %s12, 0
    %p137 = por %p135, %p136
    %p138 = scmp.ne.s32.totalorder %s130, %s132
    %p139 = scmp.eq.s32.totalorder %s17, 1
    %p140 = por %p138, %p139
    %p141 = scmp.ne.s32.totalorder %s132, %s133
    %p142 = scmp.eq.s32.totalorder %s17, 0
    %p143 = por %p141, %p142
    %p144 = scmp.ne.s32.totalorder %s132, %s133
    %p145 = scmp.eq.s32.totalorder %s18, 1
    %p146 = por %p144, %p145
    %p148 = scmp.ne.s32.totalorder %s133, %s147
    %p149 = scmp.eq.s32.totalorder %s18, 0
    %p150 = por %p148, %p149
    %s151 = ssub.s32 %s12, %s19
    %p152 = scmp.eq.s32.totalorder %s151, 0
    %s154 = sadd.s32 %s153, 1
    %s155 = scalar_select %p152, %s153, %s154
    %p158 = pneg %p152
    %p159 = scmp.eq.s32.totalorder %s12, 1
    %p160 = por %p158, %p159
    %p161 = scmp.ne.s32.totalorder %s153, %s156
    %p162 = scmp.eq.s32.totalorder %s12, 0
    %p163 = por %p161, %p162
    %p164 = scmp.ne.s32.totalorder %s153, %s156
    %p165 = scmp.eq.s32.totalorder %s17, 1
    %p166 = por %p164, %p165
    %p167 = scmp.ne.s32.totalorder %s156, %s157
    %p168 = scmp.eq.s32.totalorder %s17, 0
    %p169 = por %p167, %p168
    %p170 = scmp.ne.s32.totalorder %s156, %s157
    %p171 = scmp.eq.s32.totalorder %s18, 1
    %p172 = por %p170, %p171
    %p174 = scmp.ne.s32.totalorder %s157, %s173
    %p175 = scmp.eq.s32.totalorder %s18, 0
    %p176 = por %p174, %p175
    %p177 = scmp.le.s32.totalorder 1, %s12
    %p178 = scmp.lt.s32.totalorder %s12, 3
    %p179 = pnand %p177, %p178
    %p180 = pneg %p179
    // Predicated region
    $region9: #{_times_block_body.3} parent=5 // pred_check
      _
    $region10: #{_times_block_body.3} parent=5 // pred_check_branch
      %182 = sbr.rel (%p179) target = $region12
    $region11: #{_times_block_body.3} parent=5 // pred_region
      %s183 = ssub.s32 %s12, 1
      // Predicated region
      $region13: #{_times_block_body.3} parent=11 // pred_check
        %p184 = pneg %p59
      $region14: #{_times_block_body.3} parent=11 // pred_check_branch
        %186 = sbr.rel (%p184) target = $region16
      $region15: #{_times_block_body.3} parent=11 // pred_region
        _
      $region16: #{_times_block_body.3} parent=11 // pred_fallthru
        _
      // Predicated region
      $region17: #{_times_block_body.3} parent=11 // pred_check
        %p187 = pneg %p80
      $region18: #{_times_block_body.3} parent=11 // pred_check_branch
        %189 = sbr.rel (%p187) target = $region20
      $region19: #{_times_block_body.3} parent=11 // pred_region
        _
      $region20: #{_times_block_body.3} parent=11 // pred_fallthru
        _
      // Predicated region
      $region21: #{_times_block_body.3} parent=11 // pred_check
        %p190 = pneg %p101
      $region22: #{_times_block_body.3} parent=11 // pred_check_branch
        %192 = sbr.rel (%p190) target = $region24
      $region23: #{_times_block_body.3} parent=11 // pred_region
        _
      $region24: #{_times_block_body.3} parent=11 // pred_fallthru
        _
      // Predicated region
      $region25: #{_times_block_body.3} parent=11 // pred_check
        %p193 = pneg %p122
      $region26: #{_times_block_body.3} parent=11 // pred_check_branch
        %195 = sbr.rel (%p193) target = $region28
      $region27: #{_times_block_body.3} parent=11 // pred_region
        _
      $region28: #{_times_block_body.3} parent=11 // pred_fallthru
        _
      // Predicated region
      $region29: #{_times_block_body.3} parent=11 // pred_check
        %p196 = pneg %p143
      $region30: #{_times_block_body.3} parent=11 // pred_check_branch
        %198 = sbr.rel (%p196) target = $region32
      $region31: #{_times_block_body.3} parent=11 // pred_region
        _
      $region32: #{_times_block_body.3} parent=11 // pred_fallthru
        _
    $region12: #{_times_block_body.3} parent=5 // pred_fallthru
      _
    %p199 = scmp.lt.s32.totalorder %s12, 2
    // Predicated region
    $region33: #{_times_block_body.3} parent=5 // pred_check
      %p200 = pneg %p199
    $region34: #{_times_block_body.3} parent=5 // pred_check_branch
      %202 = sbr.rel (%p200) target = $region36
    $region35: #{_times_block_body.3} parent=5 // pred_region
      // Predicated region
      $region37: #{_times_block_body.3} parent=35 // pred_check
        %p203 = pneg %p32
      $region38: #{_times_block_body.3} parent=35 // pred_check_branch
        %205 = sbr.rel (%p203) target = $region40
      $region39: #{_times_block_body.3} parent=35 // pred_region
        %p206 = scmp.lt.s32.totalorder %s12, 1
        %s207 = scalar_select %p206, %s12, 1
        %s208 = smul.addr %s207, 3
        %s209 = smul.addr %s208, 4
        %s210 = scalar_lea.vmem %s0, %s209
      $region40: #{_times_block_body.3} parent=35 // pred_fallthru
        _
    $region36: #{_times_block_body.3} parent=5 // pred_fallthru
      _
    %p211 = scmp.le.s32.totalorder 1, %s12
    %p212 = scmp.lt.s32.totalorder %s12, 3
    %p213 = pnand %p211, %p212
    %p214 = pneg %p213
    // Predicated region
    $region41: #{_times_block_body.3} parent=5 // pred_check
      _
    $region42: #{_times_block_body.3} parent=5 // pred_check_branch
      %216 = sbr.rel (%p213) target = $region44
    $region43: #{_times_block_body.3} parent=5 // pred_region
      %s217 = ssub.s32 %s12, 1
      %p218 = scmp.lt.s32.totalorder %s17, 1
      %s219 = scalar_select %p218, %s17, 1
      %s220 = smul.addr %s219, 3
      %s221 = smul.addr %s220, 4
      %s222 = scalar_lea.vmem %s0, %s221
      %p223 = pneg %p38
      %p224 = pneg %p35
      %p225 = pneg %p59
      %p226 = pneg %p56
      %p227 = pneg %p80
      %p228 = pneg %p77
      %p229 = pneg %p101
      %p230 = pneg %p98
      %p231 = pneg %p122
      %p232 = pneg %p119
      %p233 = pneg %p143
      %p234 = pneg %p140
      %p235 = pneg %p169
      %p236 = pneg %p166
      %p237 = scmp.lt.s32.totalorder %s17, 1
      %s238 = scalar_select %p237, %s17, 1
      %s239 = smul.addr %s238, 8
      %s240 = scalar_lea.vmem %s6, %s239
      %p241 = scmp.lt.s32.totalorder %s17, 1
      %s242 = scalar_select %p241, %s17, 1
      %s243 = smul.addr %s242, 3
      %s244 = smul.addr %s243, 4
      %s245 = scalar_lea.vmem %s0, %s244
      %p246 = scmp.lt.s32.totalorder %s17, 1
      %s247 = scalar_select %p246, %s17, 1
      %s248 = smul.addr %s247, 8
      %s249 = scalar_lea.vmem %s6, %s248
      %v251 = vld [vmem:[%s245] sm:$0xff]
      %v252 = vld [vmem:[%s245 + $0x8] sm:$0xf]
      %v253 = vld [vmem:[%s1] sm:$0x3]
      %v255 = vunpack.c.l.b16 %v251
      %v256 = vunpack.c.h.b16 %v251
      %v257 = vpack.c.b16 %v255, %v255
      %v258 = vpack.c.b16 %v256, %v256
      %v260 = vunpack.c.l.b16 %v252
      %v261 = vpack.c.b16 %v260, %v260
      %262 = vrot.lane.b32.xlu0 %v257, 127
      %v263 = vpop.permute.xlu0 %262
      %264 = vrot.lane.b32.xlu0 %v258, 127
      %v265 = vpop.permute.xlu0 %264
      %266 = vrot.lane.b32.xlu0 %v261, 127
      %v267 = vpop.permute.xlu0 %266
      %vm268 = vcmask 1039360
      %v269 = vsel %vm268, %v263, %v265
      %v270 = vsel %vm268, %v265, %v267
      %271 = vrot.lane.b32.xlu0 %v257, 126
      %v272 = vpop.permute.xlu0 %271
      %273 = vrot.lane.b32.xlu0 %v258, 126
      %v274 = vpop.permute.xlu0 %273
      %275 = vrot.lane.b32.xlu0 %v261, 126
      %v276 = vpop.permute.xlu0 %275
      %vm277 = vcmask 1031168
      %v278 = vsel %vm277, %v272, %v274
      %v279 = vsel %vm277, %v274, %v276
      %280 = vrot.lane.b32.xlu0 %v257, 125
      %v281 = vpop.permute.xlu0 %280
      %282 = vrot.lane.b32.xlu0 %v258, 125
      %v283 = vpop.permute.xlu0 %282
      %284 = vrot.lane.b32.xlu0 %v261, 125
      %v285 = vpop.permute.xlu0 %284
      %vm286 = vcmask 1022976
      %v287 = vsel %vm286, %v281, %v283
      %v288 = vsel %vm286, %v283, %v285
      %289 = vrot.lane.b32.xlu0 %v257, 124
      %v290 = vpop.permute.xlu0 %289
      %291 = vrot.lane.b32.xlu0 %v258, 124
      %v292 = vpop.permute.xlu0 %291
      %293 = vrot.lane.b32.xlu0 %v261, 124
      %v294 = vpop.permute.xlu0 %293
      %vm295 = vcmask 1014784
      %v296 = vsel %vm295, %v290, %v292
      %v297 = vsel %vm295, %v292, %v294
      %298 = vrot.lane.b32.xlu0 %v257, 120
      %v299 = vpop.permute.xlu0 %298
      %300 = vrot.lane.b32.xlu0 %v258, 120
      %v301 = vpop.permute.xlu0 %300
      %302 = vrot.lane.b32.xlu0 %v261, 120
      %v303 = vpop.permute.xlu0 %302
      %vm304 = vcmask 982016
      %v305 = vsel %vm304, %v299, %v301
      %v306 = vsel %vm304, %v301, %v303
      %307 = vrot.lane.b32.xlu0 %v257, 119
      %v308 = vpop.permute.xlu0 %307
      %309 = vrot.lane.b32.xlu0 %v258, 119
      %v310 = vpop.permute.xlu0 %309
      %311 = vrot.lane.b32.xlu0 %v261, 119
      %v312 = vpop.permute.xlu0 %311
      %vm313 = vcmask 973824
      %v314 = vsel %vm313, %v308, %v310
      %v315 = vsel %vm313, %v310, %v312
      %316 = vrot.lane.b32.xlu0 %v257, 118
      %v317 = vpop.permute.xlu0 %316
      %318 = vrot.lane.b32.xlu0 %v258, 118
      %v319 = vpop.permute.xlu0 %318
      %320 = vrot.lane.b32.xlu0 %v261, 118
      %v321 = vpop.permute.xlu0 %320
      %vm322 = vcmask 965632
      %v323 = vsel %vm322, %v317, %v319
      %v324 = vsel %vm322, %v319, %v321
      %325 = vrot.lane.b32.xlu0 %v257, 117
      %v326 = vpop.permute.xlu0 %325
      %327 = vrot.lane.b32.xlu0 %v258, 117
      %v328 = vpop.permute.xlu0 %327
      %329 = vrot.lane.b32.xlu0 %v261, 117
      %v330 = vpop.permute.xlu0 %329
      %vm331 = vcmask 957440
      %v332 = vsel %vm331, %v326, %v328
      %v333 = vsel %vm331, %v328, %v330
      %334 = vrot.lane.b32.xlu0 %v257, 116
      %v335 = vpop.permute.xlu0 %334
      %336 = vrot.lane.b32.xlu0 %v258, 116
      %v337 = vpop.permute.xlu0 %336
      %338 = vrot.lane.b32.xlu0 %v261, 116
      %v339 = vpop.permute.xlu0 %338
      %vm340 = vcmask 949248
      %v341 = vsel %vm340, %v335, %v337
      %v342 = vsel %vm340, %v337, %v339
      %343 = vrot.lane.b32.xlu0 %v257, 112
      %v344 = vpop.permute.xlu0 %343
      %345 = vrot.lane.b32.xlu0 %v258, 112
      %v346 = vpop.permute.xlu0 %345
      %347 = vrot.lane.b32.xlu0 %v261, 112
      %v348 = vpop.permute.xlu0 %347
      %vm349 = vcmask 916480
      %v350 = vsel %vm349, %v344, %v346
      %v351 = vsel %vm349, %v346, %v348
      %352 = vrot.lane.b32.xlu0 %v257, 111
      %v353 = vpop.permute.xlu0 %352
      %354 = vrot.lane.b32.xlu0 %v258, 111
      %v355 = vpop.permute.xlu0 %354
      %356 = vrot.lane.b32.xlu0 %v261, 111
      %v357 = vpop.permute.xlu0 %356
      %vm358 = vcmask 908288
      %v359 = vsel %vm358, %v353, %v355
      %v360 = vsel %vm358, %v355, %v357
      %361 = vrot.lane.b32.xlu0 %v257, 110
      %v362 = vpop.permute.xlu0 %361
      %363 = vrot.lane.b32.xlu0 %v258, 110
      %v364 = vpop.permute.xlu0 %363
      %365 = vrot.lane.b32.xlu0 %v261, 110
      %v366 = vpop.permute.xlu0 %365
      %vm367 = vcmask 900096
      %v368 = vsel %vm367, %v362, %v364
      %v369 = vsel %vm367, %v364, %v366
      %370 = vrot.lane.b32.xlu0 %v257, 109
      %v371 = vpop.permute.xlu0 %370
      %372 = vrot.lane.b32.xlu0 %v258, 109
      %v373 = vpop.permute.xlu0 %372
      %374 = vrot.lane.b32.xlu0 %v261, 109
      %v375 = vpop.permute.xlu0 %374
      %vm376 = vcmask 891904
      %v377 = vsel %vm376, %v371, %v373
      %v378 = vsel %vm376, %v373, %v375
      %379 = vrot.lane.b32.xlu0 %v257, 108
      %v380 = vpop.permute.xlu0 %379
      %381 = vrot.lane.b32.xlu0 %v258, 108
      %v382 = vpop.permute.xlu0 %381
      %383 = vrot.lane.b32.xlu0 %v261, 108
      %v384 = vpop.permute.xlu0 %383
      %vm385 = vcmask 883712
      %v386 = vsel %vm385, %v380, %v382
      %v387 = vsel %vm385, %v382, %v384
      %388 = vrot.lane.b32.xlu0 %v257, 104
      %v389 = vpop.permute.xlu0 %388
      %390 = vrot.lane.b32.xlu0 %v258, 104
      %v391 = vpop.permute.xlu0 %390
      %392 = vrot.lane.b32.xlu0 %v261, 104
      %v393 = vpop.permute.xlu0 %392
      %vm394 = vcmask 850944
      %v395 = vsel %vm394, %v389, %v391
      %v396 = vsel %vm394, %v391, %v393
      %vm397 = vcmask 1043456
      %v400 = vsel %vm397, %v257, %v269
      %v404 = vsel %vm397, %v258, %v270
      %v408 = vsel %vm397, %v278, %v287
      %v412 = vsel %vm397, %v279, %v288
      %v416 = vsel %vm397, %v296, %v305
      %v420 = vsel %vm397, %v297, %v306
      %v424 = vsel %vm397, %v314, %v323
      %v428 = vsel %vm397, %v315, %v324
      %v432 = vsel %vm397, %v332, %v341
      %v436 = vsel %vm397, %v333, %v342
      %v440 = vsel %vm397, %v350, %v359
      %v444 = vsel %vm397, %v351, %v360
      %v448 = vsel %vm397, %v368, %v377
      %v452 = vsel %vm397, %v369, %v378
      %v456 = vsel %vm397, %v386, %v395
      %v460 = vsel %vm397, %v387, %v396
      %462 = vrot.lane.b32.xlu0 %v257, 121
      %v463 = vpop.permute.xlu0 %462
      %464 = vrot.lane.b32.xlu0 %v258, 121
      %v465 = vpop.permute.xlu0 %464
      %466 = vrot.lane.b32.xlu0 %v261, 121
      %v467 = vpop.permute.xlu0 %466
      %vm468 = vcmask 990208
      %v469 = vsel %vm468, %v463, %v465
      %v470 = vsel %vm468, %v465, %v467
      %v473 = vsel %vm397, %v261, %v267
      %v476 = vsel %vm397, %v276, %v285
      %v478 = vsel %vm397, %v469, %v305
      %v480 = vsel %vm397, %v470, %v306
      %v483 = vsel %vm397, %v467, %v303
      %v486 = vsel %vm397, %v312, %v321
      %499 = vrot.lane.b32.xlu0 %v400, 103
      %v500 = vpop.permute.xlu0 %499
      %501 = vrot.lane.b32.xlu0 %v404, 103
      %v502 = vpop.permute.xlu0 %501
      %503 = vrot.lane.b32.xlu0 %v473, 103
      %v504 = vpop.permute.xlu0 %503
      %505 = vrot.lane.b32.xlu0 %v408, 103
      %v506 = vpop.permute.xlu0 %505
      %507 = vrot.lane.b32.xlu0 %v412, 103
      %v508 = vpop.permute.xlu0 %507
      %509 = vrot.lane.b32.xlu0 %v476, 103
      %v510 = vpop.permute.xlu0 %509
      %511 = vrot.lane.b32.xlu0 %v478, 103
      %v512 = vpop.permute.xlu0 %511
      %513 = vrot.lane.b32.xlu0 %v480, 103
      %v514 = vpop.permute.xlu0 %513
      %515 = vrot.lane.b32.xlu0 %v483, 103
      %v516 = vpop.permute.xlu0 %515
      %517 = vrot.lane.b32.xlu0 %v424, 103
      %v518 = vpop.permute.xlu0 %517
      %519 = vrot.lane.b32.xlu0 %v428, 103
      %v520 = vpop.permute.xlu0 %519
      %521 = vrot.lane.b32.xlu0 %v486, 103
      %v522 = vpop.permute.xlu0 %521
      %523 = vrot.lane.b32.xlu0 %v332, 103
      %v524 = vpop.permute.xlu0 %523
      %525 = vrot.lane.b32.xlu0 %v333, 103
      %v526 = vpop.permute.xlu0 %525
      %527 = vrot.lane.b32.xlu0 %v330, 103
      %v528 = vpop.permute.xlu0 %527
      %vm529 = vcmask 842752
      %v530 = vsel %vm529, %v500, %v502
      %v531 = vsel %vm529, %v502, %v504
      %v532 = vsel %vm529, %v506, %v508
      %v533 = vsel %vm529, %v508, %v510
      %v534 = vsel %vm529, %v512, %v514
      %v535 = vsel %vm529, %v514, %v516
      %v536 = vsel %vm529, %v518, %v520
      %v537 = vsel %vm529, %v520, %v522
      %v538 = vsel %vm529, %v524, %v526
      %v539 = vsel %vm529, %v526, %v528
      %v548 = vld [vmem:[%s2] sm:$0xff]
      %v549 = vld [vmem:[%s2 + $0x8] sm:$0xff]
      %v550 = vld [vmem:[%s3] sm:$0xff]
      %v551 = vld [vmem:[%s3 + $0x8] sm:$0xff]
      %553 = vset.pattern.permute.xlu0 0
      %554 = vperm.xlu0 %553, %v550
      %v555 = vpop.permute.xlu0 %554
      %558 = vset.pattern.permute.xlu0 0
      %559 = vperm.xlu0 %558, %v551
      %v560 = vpop.permute.xlu0 %559
      %v564 = vunpack.c.l.b16 %v548
      %v565 = vunpack.c.h.b16 %v548
      %v566 = vunpack.c.l.b16 %v549
      %v567 = vunpack.c.h.b16 %v549
      %v568 = vpack.c.b16 %v566, %v564
      %v569 = vpack.c.b16 %v567, %v565
      %vm571 = vcmask 588800
      %v573 = vsel %vm571, %v569, 0
      %v576 = vsel %vm397, %v538, 0
      %v579 = vsel %vm397, %v539, 0
      %581 = vmatprep.subr.bf16.mxu0 %v460
      %582 = vmatpush1.bf16.msra.mxu0 %v456
      %583 = vmatprep.subr.bf16.mxu0 %v452
      %584 = vmatpush1.bf16.msra.mxu0 %v448
      %585 = vmatprep.subr.bf16.mxu0 %v444
      %586 = vmatpush1.bf16.msra.mxu0 %v440
      %587 = vmatprep.subr.bf16.mxu0 %v436
      %588 = vmatpush1.bf16.msra.mxu0 %v432
      %589 = vmatprep.subr.bf16.mxu0 %v428
      %590 = vmatpush1.bf16.msra.mxu0 %v424
      %591 = vmatprep.subr.bf16.mxu0 %v420
      %592 = vmatpush1.bf16.msra.mxu0 %v416
      %593 = vmatprep.subr.bf16.mxu0 %v412
      %594 = vmatpush1.bf16.msra.mxu0 %v408
      %595 = vmatprep.subr.bf16.mxu0 %v404
      %596 = vmatpush1.bf16.msra.mxu0 %v400
      %597 = vmatprep.subr.bf16.mxu0 0
      %598 = vmatpush2.bf16.msra.mxu0 0
      %599 = vmatprep.subr.bf16.mxu0 0
      %600 = vmatpush2.bf16.msra.mxu0 0
      %601 = vmatprep.subr.bf16.mxu0 0
      %602 = vmatpush2.bf16.msra.mxu0 0
      %603 = vmatprep.subr.bf16.mxu0 %v579
      %604 = vmatpush2.bf16.msra.mxu0 %v576
      %605 = vmatprep.subr.bf16.mxu0 %v537
      %606 = vmatpush2.bf16.msra.mxu0 %v536
      %607 = vmatprep.subr.bf16.mxu0 %v535
      %608 = vmatpush2.bf16.msra.mxu0 %v534
      %609 = vmatprep.subr.bf16.mxu0 %v533
      %610 = vmatpush2.bf16.msra.mxu0 %v532
      %611 = vmatprep.subr.bf16.mxu0 %v531
      %612 = vmatpush2.bf16.msra.mxu0 %v530
      %613 = vmatprep.mubr.bf16.mxu0 %v573
      %614 = vmatmul.mubr.bf16.gmra.mxu0 %v568
      %v615 = vpop.f32.mrf.mxu0
      %v616 = vadd.f32 %v555, %v615
      %v617 = vpop.f32.mrf.mxu0
      %v618 = vadd.f32 %v555, %v617
      %v619 = vpop.f32.mrf.mxu0
      %v620 = vadd.f32 %v560, %v619
      %v621 = vpop.f32.mrf.mxu0
      %v622 = vadd.f32 %v560, %v621
      %623 = vdwg.mxu0
      %v624 = vmul.f32 %v616, 0.5
      %v625 = vmul.f32 %v618, 0.5
      %v626 = vmul.f32 %v620, 0.5
      %v627 = vmul.f32 %v622, 0.5
      %v628 = vmul.f32 %v616, 0.70710677
      %v629 = vmul.f32 %v618, 0.70710677
      %v630 = vmul.f32 %v620, 0.70710677
      %v631 = vmul.f32 %v622, 0.70710677
      %v632 = verf.f32.pop %v628
      %v633 = verf.f32.pop %v629
      %v634 = verf.f32.pop %v630
      %v635 = verf.f32.pop %v631
      %v636 = vadd.f32 %v632, 1.0
      %v637 = vadd.f32 %v633, 1.0
      %v638 = vadd.f32 %v634, 1.0
      %v639 = vadd.f32 %v635, 1.0
      %v640 = vmul.f32 %v624, %v636
      %v641 = vmul.f32 %v625, %v637
      %v642 = vmul.f32 %v626, %v638
      %v643 = vmul.f32 %v627, %v639
      %v645 = vlaneseq
      %v646 = vshrl.u32 %v645, 7
      %v647 = vsub.s32 0, %v646
      %v648 = vrot.slane %v253, %v647
      %v649 = vlaneseq
      %v650 = vshrl.u32 %v649, 7
      %v651 = vsub.s32 1, %v650
      %v652 = vrot.slane %v253, %v651
      %v655 = vmul.f32 %v640, %v648
      %v656 = vmul.f32 %v641, %v652
      %v657 = vmul.f32 %v642, %v648
      %v658 = vmul.f32 %v643, %v652
      %v659 = vpack.c.bf16 %v657, %v655
      %v660 = vpack.c.bf16 %v658, %v656
      %663 = vrot.lane.b32.xlu0 %v659, 127
      %v664 = vpop.permute.xlu0 %663
      %665 = vrot.lane.b32.xlu0 %v660, 127
      %v666 = vpop.permute.xlu0 %665
      %v667 = vsel %vm268, %v664, %v666
      %669 = vrot.lane.b32.xlu0 %v659, 126
      %v670 = vpop.permute.xlu0 %669
      %671 = vrot.lane.b32.xlu0 %v660, 126
      %v672 = vpop.permute.xlu0 %671
      %v673 = vsel %vm277, %v670, %v672
      %675 = vrot.lane.b32.xlu0 %v659, 125
      %v676 = vpop.permute.xlu0 %675
      %677 = vrot.lane.b32.xlu0 %v660, 125
      %v678 = vpop.permute.xlu0 %677
      %v679 = vsel %vm286, %v676, %v678
      %681 = vrot.lane.b32.xlu0 %v659, 124
      %v682 = vpop.permute.xlu0 %681
      %683 = vrot.lane.b32.xlu0 %v660, 124
      %v684 = vpop.permute.xlu0 %683
      %v685 = vsel %vm295, %v682, %v684
      %687 = vrot.lane.b32.xlu0 %v659, 120
      %v688 = vpop.permute.xlu0 %687
      %689 = vrot.lane.b32.xlu0 %v660, 120
      %v690 = vpop.permute.xlu0 %689
      %v691 = vsel %vm304, %v688, %v690
      %693 = vrot.lane.b32.xlu0 %v659, 119
      %v694 = vpop.permute.xlu0 %693
      %695 = vrot.lane.b32.xlu0 %v660, 119
      %v696 = vpop.permute.xlu0 %695
      %v697 = vsel %vm313, %v694, %v696
      %699 = vrot.lane.b32.xlu0 %v659, 118
      %v700 = vpop.permute.xlu0 %699
      %701 = vrot.lane.b32.xlu0 %v660, 118
      %v702 = vpop.permute.xlu0 %701
      %v703 = vsel %vm322, %v700, %v702
      %705 = vrot.lane.b32.xlu0 %v659, 117
      %v706 = vpop.permute.xlu0 %705
      %707 = vrot.lane.b32.xlu0 %v660, 117
      %v708 = vpop.permute.xlu0 %707
      %v709 = vsel %vm331, %v706, %v708
      %711 = vrot.lane.b32.xlu0 %v659, 116
      %v712 = vpop.permute.xlu0 %711
      %713 = vrot.lane.b32.xlu0 %v660, 116
      %v714 = vpop.permute.xlu0 %713
      %v715 = vsel %vm340, %v712, %v714
      %717 = vrot.lane.b32.xlu0 %v659, 112
      %v718 = vpop.permute.xlu0 %717
      %719 = vrot.lane.b32.xlu0 %v660, 112
      %v720 = vpop.permute.xlu0 %719
      %v721 = vsel %vm349, %v718, %v720
      %723 = vrot.lane.b32.xlu0 %v659, 111
      %v724 = vpop.permute.xlu0 %723
      %725 = vrot.lane.b32.xlu0 %v660, 111
      %v726 = vpop.permute.xlu0 %725
      %v727 = vsel %vm358, %v724, %v726
      %729 = vrot.lane.b32.xlu0 %v659, 110
      %v730 = vpop.permute.xlu0 %729
      %731 = vrot.lane.b32.xlu0 %v660, 110
      %v732 = vpop.permute.xlu0 %731
      %v733 = vsel %vm367, %v730, %v732
      %735 = vrot.lane.b32.xlu0 %v659, 109
      %v736 = vpop.permute.xlu0 %735
      %737 = vrot.lane.b32.xlu0 %v660, 109
      %v738 = vpop.permute.xlu0 %737
      %v739 = vsel %vm376, %v736, %v738
      %741 = vrot.lane.b32.xlu0 %v659, 108
      %v742 = vpop.permute.xlu0 %741
      %743 = vrot.lane.b32.xlu0 %v660, 108
      %v744 = vpop.permute.xlu0 %743
      %v745 = vsel %vm385, %v742, %v744
      %747 = vrot.lane.b32.xlu0 %v659, 104
      %v748 = vpop.permute.xlu0 %747
      %749 = vrot.lane.b32.xlu0 %v660, 104
      %v750 = vpop.permute.xlu0 %749
      %v751 = vsel %vm394, %v748, %v750
      %753 = vrot.lane.b32.xlu0 %v659, 121
      %v754 = vpop.permute.xlu0 %753
      %755 = vrot.lane.b32.xlu0 %v660, 121
      %v756 = vpop.permute.xlu0 %755
      %v757 = vsel %vm468, %v754, %v756
      %758 = vrot.lane.b32.xlu0 %v659, 103
      %v759 = vpop.permute.xlu0 %758
      %760 = vrot.lane.b32.xlu0 %v660, 103
      %v761 = vpop.permute.xlu0 %760
      %762 = vrot.lane.b32.xlu0 %v667, 103
      %v763 = vpop.permute.xlu0 %762
      %764 = vrot.lane.b32.xlu0 %v666, 103
      %v765 = vpop.permute.xlu0 %764
      %766 = vrot.lane.b32.xlu0 %v673, 103
      %v767 = vpop.permute.xlu0 %766
      %768 = vrot.lane.b32.xlu0 %v672, 103
      %v769 = vpop.permute.xlu0 %768
      %770 = vrot.lane.b32.xlu0 %v679, 103
      %v771 = vpop.permute.xlu0 %770
      %772 = vrot.lane.b32.xlu0 %v678, 103
      %v773 = vpop.permute.xlu0 %772
      %774 = vrot.lane.b32.xlu0 %v757, 103
      %v775 = vpop.permute.xlu0 %774
      %776 = vrot.lane.b32.xlu0 %v756, 103
      %v777 = vpop.permute.xlu0 %776
      %778 = vrot.lane.b32.xlu0 %v691, 103
      %v779 = vpop.permute.xlu0 %778
      %780 = vrot.lane.b32.xlu0 %v690, 103
      %v781 = vpop.permute.xlu0 %780
      %782 = vrot.lane.b32.xlu0 %v697, 103
      %v783 = vpop.permute.xlu0 %782
      %784 = vrot.lane.b32.xlu0 %v696, 103
      %v785 = vpop.permute.xlu0 %784
      %786 = vrot.lane.b32.xlu0 %v703, 103
      %v787 = vpop.permute.xlu0 %786
      %788 = vrot.lane.b32.xlu0 %v702, 103
      %v789 = vpop.permute.xlu0 %788
      %790 = vrot.lane.b32.xlu0 %v709, 103
      %v791 = vpop.permute.xlu0 %790
      %792 = vrot.lane.b32.xlu0 %v708, 103
      %v793 = vpop.permute.xlu0 %792
      %v794 = vsel %vm529, %v759, %v761
      %v795 = vsel %vm529, %v763, %v765
      %v796 = vsel %vm529, %v767, %v769
      %v797 = vsel %vm529, %v771, %v773
      %v798 = vsel %vm529, %v775, %v777
      %v799 = vsel %vm529, %v779, %v781
      %v800 = vsel %vm529, %v783, %v785
      %v801 = vsel %vm529, %v787, %v789
      %v802 = vsel %vm529, %v791, %v793
      %v812 = vld [vmem:[%s4] sm:$0xff]
      %v813 = vld [vmem:[%s4 + $0x8] sm:$0xff]
      %v814 = vld [vmem:[%s5] sm:$0xff]
      %816 = vset.pattern.permute.xlu0 0
      %817 = vperm.xlu0 %816, %v814
      %v818 = vpop.permute.xlu0 %817
      %v822 = vunpack.c.l.b16 %v812
      %v823 = vunpack.c.h.b16 %v812
      %v824 = vunpack.c.l.b16 %v813
      %v825 = vunpack.c.h.b16 %v813
      %v826 = vpack.c.b16 %v822, %v822
      %v827 = vpack.c.b16 %v823, %v823
      %v828 = vpack.c.b16 %v824, %v824
      %v829 = vpack.c.b16 %v825, %v825
      %vm833 = vcmask 130048
      %v835 = vsel %vm833, %v829, 0
      %837 = vmatprep.subr.bf16.mxu0 0
      %838 = vmatpush1.bf16.msra.mxu0 %v703
      %839 = vmatprep.subr.bf16.mxu0 0
      %840 = vmatpush1.bf16.msra.mxu0 %v697
      %841 = vmatprep.subr.bf16.mxu0 0
      %842 = vmatpush1.bf16.msra.mxu0 %v691
      %843 = vmatprep.subr.bf16.mxu0 0
      %844 = vmatpush1.bf16.msra.mxu0 %v685
      %845 = vmatprep.subr.bf16.mxu0 0
      %846 = vmatpush1.bf16.msra.mxu0 %v679
      %847 = vmatprep.subr.bf16.mxu0 0
      %848 = vmatpush1.bf16.msra.mxu0 %v673
      %849 = vmatprep.subr.bf16.mxu0 0
      %850 = vmatpush1.bf16.msra.mxu0 %v667
      %851 = vmatprep.subr.bf16.mxu0 0
      %852 = vmatpush1.bf16.msra.mxu0 %v659
      %853 = vmatprep.subr.bf16.mxu0 0
      %854 = vmatpush2.bf16.msra.mxu0 %v751
      %855 = vmatprep.subr.bf16.mxu0 0
      %856 = vmatpush2.bf16.msra.mxu0 %v745
      %857 = vmatprep.subr.bf16.mxu0 0
      %858 = vmatpush2.bf16.msra.mxu0 %v739
      %859 = vmatprep.subr.bf16.mxu0 0
      %860 = vmatpush2.bf16.msra.mxu0 %v733
      %861 = vmatprep.subr.bf16.mxu0 0
      %862 = vmatpush2.bf16.msra.mxu0 %v727
      %863 = vmatprep.subr.bf16.mxu0 0
      %864 = vmatpush2.bf16.msra.mxu0 %v721
      %865 = vmatprep.subr.bf16.mxu0 0
      %866 = vmatpush2.bf16.msra.mxu0 %v715
      %867 = vmatprep.subr.bf16.mxu0 0
      %868 = vmatpush2.bf16.msra.mxu0 %v709
      %869 = vmatprep.mubr.bf16.mxu0 %v827
      %870 = vmatmul.mubr.bf16.gmra.mxu0 %v826
      %v871 = vpop.f32.mrf.mxu0
      %v872 = vadd.f32 %v818, %v871
      %v873 = vpop.f32.mrf.mxu0
      %v874 = vpop.f32.mrf.mxu0
      %v875 = vpop.f32.mrf.mxu0
      %876 = vdwg.mxu0
      %877 = vmatprep.subr.bf16.mxu0 0
      %878 = vmatpush1.bf16.msra.mxu0 %v801
      %879 = vmatprep.subr.bf16.mxu0 0
      %880 = vmatpush1.bf16.msra.mxu0 %v800
      %881 = vmatprep.subr.bf16.mxu0 0
      %882 = vmatpush1.bf16.msra.mxu0 %v799
      %883 = vmatprep.subr.bf16.mxu0 0
      %884 = vmatpush1.bf16.msra.mxu0 %v798
      %885 = vmatprep.subr.bf16.mxu0 0
      %886 = vmatpush1.bf16.msra.mxu0 %v797
      %887 = vmatprep.subr.bf16.mxu0 0
      %888 = vmatpush1.bf16.msra.mxu0 %v796
      %889 = vmatprep.subr.bf16.mxu0 0
      %890 = vmatpush1.bf16.msra.mxu0 %v795
      %891 = vmatprep.subr.bf16.mxu0 0
      %892 = vmatpush1.bf16.msra.mxu0 %v794
      %893 = vmatprep.subr.bf16.mxu0 0
      %894 = vmatpush2.bf16.msra.mxu0 0
      %895 = vmatprep.subr.bf16.mxu0 0
      %896 = vmatpush2.bf16.msra.mxu0 0
      %897 = vmatprep.subr.bf16.mxu0 0
      %898 = vmatpush2.bf16.msra.mxu0 0
      %899 = vmatprep.subr.bf16.mxu0 0
      %900 = vmatpush2.bf16.msra.mxu0 0
      %901 = vmatprep.subr.bf16.mxu0 0
      %902 = vmatpush2.bf16.msra.mxu0 0
      %903 = vmatprep.subr.bf16.mxu0 0
      %904 = vmatpush2.bf16.msra.mxu0 0
      %905 = vmatprep.subr.bf16.mxu0 0
      %906 = vmatpush2.bf16.msra.mxu0 0
      %907 = vmatprep.subr.bf16.mxu0 0
      %908 = vmatpush2.bf16.msra.mxu0 %v802
      %909 = vmatprep.mubr.bf16.mxu0 %v835
      %910 = vmatmul.mubr.bf16.gmra.mxu0 %v828
      %v911 = vpop.f32.mrf.mxu0
      %v912 = vadd.f32 %v872, %v911
      %v913 = vpop.f32.mrf.mxu0
      %v914 = vpop.f32.mrf.mxu0
      %v915 = vpop.f32.mrf.mxu0
      %916 = vdwg.mxu0
      %917 = vst [vmem:[%s249] sm:$0xff] %v912
      %p918 = scmp.lt.s32.totalorder %s17, 1
      %s919 = scalar_select %p918, %s17, 1
      %s920 = smul.addr %s919, 8
      %s921 = scalar_lea.vmem %s6, %s920
      // Predicated region
      $region45: #{_times_block_body.3} parent=43 // pred_check
        %p922 = pneg %p166
      $region46: #{_times_block_body.3} parent=43 // pred_check_branch
        %924 = sbr.rel (%p922) target = $region48
      $region47: #{_times_block_body.3} parent=43 // pred_region
        _
      $region48: #{_times_block_body.3} parent=43 // pred_fallthru
        _
    $region44: #{_times_block_body.3} parent=5 // pred_fallthru
      _
    %p925 = scmp.le.s32.totalorder 2, %s12
    // Predicated region
    $region49: #{_times_block_body.3} parent=5 // pred_check
      %p926 = pneg %p925
    $region50: #{_times_block_body.3} parent=5 // pred_check_branch
      %928 = sbr.rel (%p926) target = $region52
    $region51: #{_times_block_body.3} parent=5 // pred_region
      %s929 = ssub.s32 %s12, 2
      // Predicated region
      $region53: #{_times_block_body.3} parent=51 // pred_check
        %p930 = pneg %p172
      $region54: #{_times_block_body.3} parent=51 // pred_check_branch
        %932 = sbr.rel (%p930) target = $region56
      $region55: #{_times_block_body.3} parent=51 // pred_region
        %p933 = scmp.lt.s32.totalorder %s18, 1
        %s934 = scalar_select %p933, %s18, 1
        %s935 = smul.addr %s934, 8
        %s936 = scalar_lea.vmem %s6, %s935
      $region56: #{_times_block_body.3} parent=51 // pred_fallthru
        _
    $region52: #{_times_block_body.3} parent=5 // pred_fallthru
      _
  $region6: #{_times_block_body.3} parent=0 // loop_footer
    %s16 = sadd.s32 1, %s12
  $region7: #{_times_block_body.3} parent=0 // loop_footer_branch
    %11 = sbr.rel target = $region3
  $region8: #{_times_block_body.3} parent=0 // loop_exit
    _

</llo_original>
